<compile_context>
chip_gen: v7x
topology: tpu7x:2x2x1
jax: 0.10.0
libtpu: 0.0.40
codegen_flags: <defaults>
</compile_context>

<pallas_src>
import functools

import jax
import jax.numpy as jnp
import numpy as np
from jax.experimental import pallas as pl
from jax.experimental.pallas import tpu as pltpu


def _round_up(x, m):
    return (x + m - 1) // m * m


def _cdiv(a, b):
    return (a + b - 1) // b


def _mlp_kernel(x_ref, *refs, n_layers, compute_dtype):
    """Fused MLP over one batch tile.

    refs = (w0, b0, w1, b1, ..., w_{L-1}, b_{L-1}, out_ref)
      w_l : [in_f_l, out_f_l]  (pre-transposed, compute_dtype)
      b_l : [1, out_f_l]       (compute_dtype for hidden layers, f32 for last)
    ReLU after every layer except the last; dropout is identity (eval mode).
    MXU accumulation is always f32.
    """
    o_ref = refs[-1]
    params = refs[:-1]
    h = x_ref[...]
    for l in range(n_layers):
        w = params[2 * l][...]
        b = params[2 * l + 1][...]
        acc = jnp.dot(h, w, preferred_element_type=jnp.float32)
        if l < n_layers - 1:
            # Fused bias-add + ReLU epilogue in the compute dtype: one pass
            # over the activation, result already in the next MXU input dtype.
            # TODO(synk): training-mode dropout mask would be applied here.
            h = jnp.maximum(acc.astype(compute_dtype) + b, 0)
        else:
            h = acc + b.astype(jnp.float32)          # final bias in f32
    o_ref[...] = h.astype(o_ref.dtype)


def interp_mlp_forward(x, weights, biases, *, block_n=1024, use_bf16=True):
    """Forward pass of Interp_MLP (eval mode).

    x:        [N, in_dim] float32
    weights:  list of [out_f, in_f] float32 (PyTorch nn.Linear convention)
    biases:   list of [out_f] float32
    returns:  [N, out_dim] float32
    """
    n, in_dim = x.shape
    n_layers = len(weights)
    out_dim = weights[-1].shape[0]

    compute_dtype = jnp.bfloat16 if use_bf16 else jnp.float32
    out_store_dtype = jnp.bfloat16 if use_bf16 else jnp.float32

    # Pre-transpose weights to [in_f, out_f]; biases as 2-D [1, out_f].
    wts = [jnp.asarray(w, jnp.float32).T.astype(compute_dtype) for w in weights]
    bs = [jnp.asarray(b, jnp.float32).reshape(1, -1) for b in biases]
    # Hidden-layer biases join the fused epilogue in compute dtype; the last
    # bias stays f32 (added on the f32 accumulator for output accuracy).
    bs = [b.astype(compute_dtype) for b in bs[:-1]] + [bs[-1]]

    # Lane-dense output: pad out_dim up to a multiple of 128, slice later.
    out_p = _round_up(out_dim, 128)
    if out_p != out_dim:
        wts[-1] = jnp.pad(wts[-1], ((0, 0), (0, out_p - out_dim)))
        bs[-1] = jnp.pad(bs[-1], ((0, 0), (0, out_p - out_dim)))

    x_in = x.astype(compute_dtype)

    # ----- batch tiling -----------------------------------------------------
    # bf16 packs 16 rows per (sublane, lane) tile -> align tn to 16.
    tn_align = 16 if use_bf16 else 8
    min_tn = 8 * tn_align
    tn = _round_up(min(block_n, _round_up(n, tn_align)), tn_align)
    # Keep >= 4 grid steps where possible so each v7x TensorCore still gets
    # >= 2 steps of intra-core double buffering.
    while tn > min_tn and _cdiv(n, tn) < 4:
        tn = _round_up(max(tn // 2, min_tn), tn_align)

    def vmem_estimate(tn_):
        lane = 128
        it_c = jnp.dtype(compute_dtype).itemsize
        it_o = jnp.dtype(out_store_dtype).itemsize
        est = 2 * tn_ * _round_up(in_dim, lane) * it_c          # x tile (2 bufs)
        est += 2 * tn_ * out_p * it_o                           # out tile (2 bufs)
        for w in wts:                                           # single-buffered
            est += _round_up(w.shape[0], 8) * _round_up(w.shape[1], lane) * w.dtype.itemsize
        for b in bs:
            est += 8 * _round_up(b.shape[1], lane) * b.dtype.itemsize
        widest = max(w.shape[1] for w in wts)
        est += 3 * tn_ * _round_up(widest, lane) * 4            # live f32 activations
        return est

    # Keep comfortably under v7x's 64 MiB physical VMEM (and all other gens).
    vmem_cap = 40 * 1024 * 1024
    while tn > min_tn and vmem_estimate(tn) > vmem_cap:
        tn = _round_up(max(tn // 2, min_tn), tn_align)

    n_p = _round_up(n, tn)
    if n_p != n:
        x_in = jnp.pad(x_in, ((0, n_p - n), (0, 0)))
    grid = (n_p // tn,)

    vmem_limit = int(min(48 * 1024 * 1024,
                         max(32 * 1024 * 1024, int(vmem_estimate(tn) * 1.5))))

    # ----- BlockSpecs --------------------------------------------------------
    # x / out are tiled over N; every weight/bias is a constant block
    # (lambda i: (0, 0)), DMA'd once, VMEM-resident, single-buffered.
    in_specs = [pl.BlockSpec((tn, in_dim), lambda i: (i, 0))]
    params_flat = []
    const_idx = lambda i: (0, 0)  # noqa: E731
    for w, b in zip(wts, bs):
        in_specs.append(
            pl.BlockSpec(w.shape, const_idx, pipeline_mode=pl.Buffered(1)))
        in_specs.append(
            pl.BlockSpec(b.shape, const_idx, pipeline_mode=pl.Buffered(1)))
        params_flat += [w, b]
    out_specs = pl.BlockSpec((tn, out_p), lambda i: (i, 0))

    kernel = functools.partial(_mlp_kernel, n_layers=n_layers,
                               compute_dtype=compute_dtype)

    flops = 2 * n_p * sum(w.shape[0] * w.shape[1] for w in wts)
    bytes_accessed = (
        x_in.size * x_in.dtype.itemsize
        + sum(w.size * w.dtype.itemsize for w in wts)
        + sum(b.size * b.dtype.itemsize for b in bs)
        + n_p * out_p * jnp.dtype(out_store_dtype).itemsize)

    y = pl.pallas_call(
        kernel,
        out_shape=jax.ShapeDtypeStruct((n_p, out_p), out_store_dtype),
        grid_spec=pltpu.PrefetchScalarGridSpec(
            num_scalar_prefetch=0,
            grid=grid,
            in_specs=in_specs,
            out_specs=out_specs,
        ),
        compiler_params=pltpu.CompilerParams(
            dimension_semantics=("parallel",),      # v7x's 2 TCs split N
            vmem_limit_bytes=vmem_limit,
        ),
        cost_estimate=pl.CostEstimate(
            flops=flops, transcendentals=0, bytes_accessed=bytes_accessed),
    )(x_in, *params_flat)

    return y[:n, :out_dim].astype(jnp.float32)


def init_mlp_params(key, in_dim, out_dim, width, depth):
    """Deterministic nn.Linear-style init: U(-1/sqrt(fan_in), 1/sqrt(fan_in))."""
    dims = [in_dim] + [width] * (depth - 1) + [out_dim]
    keys = jax.random.split(key, 2 * depth)
    weights, biases = [], []
    for l in range(depth):
        fan_in, fan_out = dims[l], dims[l + 1]
        bound = 1.0 / np.sqrt(fan_in)
        w = jax.random.uniform(keys[2 * l], (fan_out, fan_in), jnp.float32,
                               minval=-bound, maxval=bound)
        b = jax.random.uniform(keys[2 * l + 1], (fan_out,), jnp.float32,
                               minval=-bound, maxval=bound)
        weights.append(w)
        biases.append(b)
    return weights, biases


if __name__ == "__main__":
    key = jax.random.PRNGKey(0)
    k_x, k_p = jax.random.split(key)

    # Interp_MLP defaults: width=128, depth=5. Small in/out dims; N chosen as
    # a non-multiple of the tile to exercise padding and grid sizing.
    in_dim, out_dim, width, depth = 4, 3, 128, 5
    n = 1000

    x = jax.random.normal(k_x, (n, in_dim), dtype=jnp.float32)
    weights, biases = init_mlp_params(k_p, in_dim, out_dim, width, depth)

    # Plain-JAX reference (eval mode: dropout = identity).
    h = x
    for l in range(depth):
        h = jnp.dot(h, weights[l].T,
                    precision=jax.lax.Precision.HIGHEST) + biases[l]
        if l < depth - 1:
            h = jnp.maximum(h, 0.0)
    ref = np.asarray(h)

    # Default path: bf16 MXU operands + bf16 fused epilogue, f32 accumulation.
    out = jax.block_until_ready(interp_mlp_forward(x, weights, biases))
    np.testing.assert_allclose(np.asarray(out), ref, rtol=1e-1, atol=5e-2)

    # f32 MXU path (tighter tolerance).
    out_f32 = jax.block_until_ready(
        interp_mlp_forward(x, weights, biases, use_bf16=False))
    np.testing.assert_allclose(np.asarray(out_f32), ref, rtol=2e-3, atol=2e-3)

    print("KERNEL_OK")
</pallas_src>

<mosaic_0001>
module attributes {stable_mosaic.version = 11 : i64} {
  func.func @_mlp_kernel(%arg0: i32, %arg1: memref<256x4xbf16, #tpu.memory_space<vmem>>, %arg2: memref<4x128xbf16, #tpu.memory_space<vmem>>, %arg3: memref<1x128xbf16, #tpu.memory_space<vmem>>, %arg4: memref<128x128xbf16, #tpu.memory_space<vmem>>, %arg5: memref<1x128xbf16, #tpu.memory_space<vmem>>, %arg6: memref<128x128xbf16, #tpu.memory_space<vmem>>, %arg7: memref<1x128xbf16, #tpu.memory_space<vmem>>, %arg8: memref<128x128xbf16, #tpu.memory_space<vmem>>, %arg9: memref<1x128xbf16, #tpu.memory_space<vmem>>, %arg10: memref<128x128xbf16, #tpu.memory_space<vmem>>, %arg11: memref<1x128xf32, #tpu.memory_space<vmem>>, %arg12: memref<256x128xbf16, #tpu.memory_space<vmem>>) attributes {dimension_semantics = [#tpu.dimension_semantics<parallel>], iteration_bounds = array<i64: 4>, scalar_prefetch = 0 : i64, scratch_operands = 0 : i64, tpu.core_type = #tpu.core_type<tc>, window_params = [{transform_indices = @transform_0, window_bounds = array<i64: 256, 4>}, {pipeline_mode = #tpu.pipeline_mode<synchronous>, transform_indices = @transform_1, window_bounds = array<i64: 4, 128>}, {pipeline_mode = #tpu.pipeline_mode<synchronous>, transform_indices = @transform_2, window_bounds = array<i64: 1, 128>}, {pipeline_mode = #tpu.pipeline_mode<synchronous>, transform_indices = @transform_3, window_bounds = array<i64: 128, 128>}, {pipeline_mode = #tpu.pipeline_mode<synchronous>, transform_indices = @transform_4, window_bounds = array<i64: 1, 128>}, {pipeline_mode = #tpu.pipeline_mode<synchronous>, transform_indices = @transform_5, window_bounds = array<i64: 128, 128>}, {pipeline_mode = #tpu.pipeline_mode<synchronous>, transform_indices = @transform_6, window_bounds = array<i64: 1, 128>}, {pipeline_mode = #tpu.pipeline_mode<synchronous>, transform_indices = @transform_7, window_bounds = array<i64: 128, 128>}, {pipeline_mode = #tpu.pipeline_mode<synchronous>, transform_indices = @transform_8, window_bounds = array<i64: 1, 128>}, {pipeline_mode = #tpu.pipeline_mode<synchronous>, transform_indices = @transform_9, window_bounds = array<i64: 128, 128>}, {pipeline_mode = #tpu.pipeline_mode<synchronous>, transform_indices = @transform_10, window_bounds = array<i64: 1, 128>}, {transform_indices = @transform_11, window_bounds = array<i64: 256, 128>}]} {
    %c0 = arith.constant 0 : index
    %c0_0 = arith.constant 0 : index
    %0 = vector.load %arg1[%c0, %c0_0] : memref<256x4xbf16, #tpu.memory_space<vmem>>, vector<256x4xbf16>
    %c0_1 = arith.constant 0 : index
    %c0_2 = arith.constant 0 : index
    %1 = vector.load %arg2[%c0_1, %c0_2] : memref<4x128xbf16, #tpu.memory_space<vmem>>, vector<4x128xbf16>
    %c0_3 = arith.constant 0 : index
    %c0_4 = arith.constant 0 : index
    %2 = vector.load %arg3[%c0_3, %c0_4] : memref<1x128xbf16, #tpu.memory_space<vmem>>, vector<1x128xbf16>
    %cst = arith.constant dense<0.000000e+00> : vector<256x128xf32>
    %3 = tpu.matmul %0, %1, %cst {dimension_numbers = #tpu.dot_dimension_numbers<[1], [0], [0], [1], [0, 0, 1, 1], [], []>} : vector<256x4xbf16>, vector<4x128xbf16>, vector<256x128xf32> -> vector<256x128xf32>
    %4 = arith.truncf %3 : vector<256x128xf32> to vector<256x128xbf16>
    %5 = vector.broadcast %2 : vector<1x128xbf16> to vector<256x128xbf16>
    %6 = arith.addf %4, %5 : vector<256x128xbf16>
    %cst_5 = arith.constant 0.000000e+00 : bf16
    %7 = vector.broadcast %cst_5 : bf16 to vector<256x128xbf16>
    %8 = arith.maximumf %6, %7 : vector<256x128xbf16>
    %c0_6 = arith.constant 0 : index
    %c0_7 = arith.constant 0 : index
    %9 = vector.load %arg4[%c0_6, %c0_7] : memref<128x128xbf16, #tpu.memory_space<vmem>>, vector<128x128xbf16>
    %c0_8 = arith.constant 0 : index
    %c0_9 = arith.constant 0 : index
    %10 = vector.load %arg5[%c0_8, %c0_9] : memref<1x128xbf16, #tpu.memory_space<vmem>>, vector<1x128xbf16>
    %cst_10 = arith.constant dense<0.000000e+00> : vector<256x128xf32>
    %11 = tpu.matmul %8, %9, %cst_10 {dimension_numbers = #tpu.dot_dimension_numbers<[1], [0], [0], [1], [0, 0, 1, 1], [], []>} : vector<256x128xbf16>, vector<128x128xbf16>, vector<256x128xf32> -> vector<256x128xf32>
    %12 = arith.truncf %11 : vector<256x128xf32> to vector<256x128xbf16>
    %13 = vector.broadcast %10 : vector<1x128xbf16> to vector<256x128xbf16>
    %14 = arith.addf %12, %13 : vector<256x128xbf16>
    %cst_11 = arith.constant 0.000000e+00 : bf16
    %15 = vector.broadcast %cst_11 : bf16 to vector<256x128xbf16>
    %16 = arith.maximumf %14, %15 : vector<256x128xbf16>
    %c0_12 = arith.constant 0 : index
    %c0_13 = arith.constant 0 : index
    %17 = vector.load %arg6[%c0_12, %c0_13] : memref<128x128xbf16, #tpu.memory_space<vmem>>, vector<128x128xbf16>
    %c0_14 = arith.constant 0 : index
    %c0_15 = arith.constant 0 : index
    %18 = vector.load %arg7[%c0_14, %c0_15] : memref<1x128xbf16, #tpu.memory_space<vmem>>, vector<1x128xbf16>
    %cst_16 = arith.constant dense<0.000000e+00> : vector<256x128xf32>
    %19 = tpu.matmul %16, %17, %cst_16 {dimension_numbers = #tpu.dot_dimension_numbers<[1], [0], [0], [1], [0, 0, 1, 1], [], []>} : vector<256x128xbf16>, vector<128x128xbf16>, vector<256x128xf32> -> vector<256x128xf32>
    %20 = arith.truncf %19 : vector<256x128xf32> to vector<256x128xbf16>
    %21 = vector.broadcast %18 : vector<1x128xbf16> to vector<256x128xbf16>
    %22 = arith.addf %20, %21 : vector<256x128xbf16>
    %cst_17 = arith.constant 0.000000e+00 : bf16
    %23 = vector.broadcast %cst_17 : bf16 to vector<256x128xbf16>
    %24 = arith.maximumf %22, %23 : vector<256x128xbf16>
    %c0_18 = arith.constant 0 : index
    %c0_19 = arith.constant 0 : index
    %25 = vector.load %arg8[%c0_18, %c0_19] : memref<128x128xbf16, #tpu.memory_space<vmem>>, vector<128x128xbf16>
    %c0_20 = arith.constant 0 : index
    %c0_21 = arith.constant 0 : index
    %26 = vector.load %arg9[%c0_20, %c0_21] : memref<1x128xbf16, #tpu.memory_space<vmem>>, vector<1x128xbf16>
    %cst_22 = arith.constant dense<0.000000e+00> : vector<256x128xf32>
    %27 = tpu.matmul %24, %25, %cst_22 {dimension_numbers = #tpu.dot_dimension_numbers<[1], [0], [0], [1], [0, 0, 1, 1], [], []>} : vector<256x128xbf16>, vector<128x128xbf16>, vector<256x128xf32> -> vector<256x128xf32>
    %28 = arith.truncf %27 : vector<256x128xf32> to vector<256x128xbf16>
    %29 = vector.broadcast %26 : vector<1x128xbf16> to vector<256x128xbf16>
    %30 = arith.addf %28, %29 : vector<256x128xbf16>
    %cst_23 = arith.constant 0.000000e+00 : bf16
    %31 = vector.broadcast %cst_23 : bf16 to vector<256x128xbf16>
    %32 = arith.maximumf %30, %31 : vector<256x128xbf16>
    %c0_24 = arith.constant 0 : index
    %c0_25 = arith.constant 0 : index
    %33 = vector.load %arg10[%c0_24, %c0_25] : memref<128x128xbf16, #tpu.memory_space<vmem>>, vector<128x128xbf16>
    %c0_26 = arith.constant 0 : index
    %c0_27 = arith.constant 0 : index
    %34 = vector.load %arg11[%c0_26, %c0_27] : memref<1x128xf32, #tpu.memory_space<vmem>>, vector<1x128xf32>
    %cst_28 = arith.constant dense<0.000000e+00> : vector<256x128xf32>
    %35 = tpu.matmul %32, %33, %cst_28 {dimension_numbers = #tpu.dot_dimension_numbers<[1], [0], [0], [1], [0, 0, 1, 1], [], []>} : vector<256x128xbf16>, vector<128x128xbf16>, vector<256x128xf32> -> vector<256x128xf32>
    %36 = vector.broadcast %34 : vector<1x128xf32> to vector<256x128xf32>
    %37 = arith.addf %35, %36 : vector<256x128xf32>
    %38 = arith.truncf %37 : vector<256x128xf32> to vector<256x128xbf16>
    %c0_29 = arith.constant 0 : index
    %c0_30 = arith.constant 0 : index
    %39 = vector.load %arg12[%c0_29, %c0_30] : memref<256x128xbf16, #tpu.memory_space<vmem>>, vector<256x128xbf16>
    tpu.vector_store %arg12[%c0_29, %c0_30], %38 {strides = array<i32>} : memref<256x128xbf16, #tpu.memory_space<vmem>>, vector<256x128xbf16>,
    return
  }
  func.func @transform_0(%arg0: i32) -> (i32, i32) {
    %c0_i32 = arith.constant 0 : i32
    %c0_i32_0 = arith.constant 0 : i32
    return %arg0, %c0_i32 : i32, i32
  }
  func.func @transform_1(%arg0: i32) -> (i32, i32) {
    %c0_i32 = arith.constant 0 : i32
    %c0_i32_0 = arith.constant 0 : i32
    %c0_i32_1 = arith.constant 0 : i32
    return %c0_i32, %c0_i32_0 : i32, i32
  }
  func.func @transform_2(%arg0: i32) -> (i32, i32) {
    %c0_i32 = arith.constant 0 : i32
    %c0_i32_0 = arith.constant 0 : i32
    %c0_i32_1 = arith.constant 0 : i32
    return %c0_i32, %c0_i32_0 : i32, i32
  }
  func.func @transform_3(%arg0: i32) -> (i32, i32) {
    %c0_i32 = arith.constant 0 : i32
    %c0_i32_0 = arith.constant 0 : i32
    %c0_i32_1 = arith.constant 0 : i32
    return %c0_i32, %c0_i32_0 : i32, i32
  }
  func.func @transform_4(%arg0: i32) -> (i32, i32) {
    %c0_i32 = arith.constant 0 : i32
    %c0_i32_0 = arith.constant 0 : i32
    %c0_i32_1 = arith.constant 0 : i32
    return %c0_i32, %c0_i32_0 : i32, i32
  }
  func.func @transform_5(%arg0: i32) -> (i32, i32) {
    %c0_i32 = arith.constant 0 : i32
    %c0_i32_0 = arith.constant 0 : i32
    %c0_i32_1 = arith.constant 0 : i32
    return %c0_i32, %c0_i32_0 : i32, i32
  }
  func.func @transform_6(%arg0: i32) -> (i32, i32) {
    %c0_i32 = arith.constant 0 : i32
    %c0_i32_0 = arith.constant 0 : i32
    %c0_i32_1 = arith.constant 0 : i32
    return %c0_i32, %c0_i32_0 : i32, i32
  }
  func.func @transform_7(%arg0: i32) -> (i32, i32) {
    %c0_i32 = arith.constant 0 : i32
    %c0_i32_0 = arith.constant 0 : i32
    %c0_i32_1 = arith.constant 0 : i32
    return %c0_i32, %c0_i32_0 : i32, i32
  }
  func.func @transform_8(%arg0: i32) -> (i32, i32) {
    %c0_i32 = arith.constant 0 : i32
    %c0_i32_0 = arith.constant 0 : i32
    %c0_i32_1 = arith.constant 0 : i32
    return %c0_i32, %c0_i32_0 : i32, i32
  }
  func.func @transform_9(%arg0: i32) -> (i32, i32) {
    %c0_i32 = arith.constant 0 : i32
    %c0_i32_0 = arith.constant 0 : i32
    %c0_i32_1 = arith.constant 0 : i32
    return %c0_i32, %c0_i32_0 : i32, i32
  }
  func.func @transform_10(%arg0: i32) -> (i32, i32) {
    %c0_i32 = arith.constant 0 : i32
    %c0_i32_0 = arith.constant 0 : i32
    %c0_i32_1 = arith.constant 0 : i32
    return %c0_i32, %c0_i32_0 : i32, i32
  }
  func.func @transform_11(%arg0: i32) -> (i32, i32) {
    %c0_i32 = arith.constant 0 : i32
    %c0_i32_0 = arith.constant 0 : i32
    return %arg0, %c0_i32 : i32, i32
  }
}

</mosaic_0001>

<llo_original>
// kernel: tpu_custom_call.1
$region0: #{tpu_custom_call.1}
  #allocation0 [shape = 'u32[]', space=smem, size = 0x4, offset = 0x4, fixed_abs, tag = 'smem constant byte address 0x4 - core index']
  #allocation1 [shape = 'u32[144,128]{1,0:T(1,128)}', space=vmem, size = 0x12000, scoped, tag = 'internal scratch']
  %s0 = inlined_call_operand.vmem [shape: bf16[1024,4], index: 0, kind: input, shape index: {}]
  %s1 = inlined_call_operand.vmem [shape: bf16[4,128], index: 1, kind: input, shape index: {}]
  %s2 = inlined_call_operand.vmem [shape: bf16[1,128], index: 2, kind: input, shape index: {}]
  %s3 = inlined_call_operand.vmem [shape: bf16[128,128], index: 3, kind: input, shape index: {}]
  %s4 = inlined_call_operand.vmem [shape: bf16[1,128], index: 4, kind: input, shape index: {}]
  %s5 = inlined_call_operand.vmem [shape: bf16[128,128], index: 5, kind: input, shape index: {}]
  %s6 = inlined_call_operand.vmem [shape: bf16[1,128], index: 6, kind: input, shape index: {}]
  %s7 = inlined_call_operand.vmem [shape: bf16[128,128], index: 7, kind: input, shape index: {}]
  %s8 = inlined_call_operand.vmem [shape: bf16[1,128], index: 8, kind: input, shape index: {}]
  %s9 = inlined_call_operand.vmem [shape: bf16[128,128], index: 9, kind: input, shape index: {}]
  %s10 = inlined_call_operand.vmem [shape: f32[1,128], index: 10, kind: input, shape index: {}]
  %s11 = inlined_call_operand.hbm [shape: bf16[1024,128], index: 11, kind: output, shape index: {}]
  %s12 = sld [smem:[#allocation0]]
  $region77: #{tpu_custom_call.1} parent=0
    _
  %s14 = ssub.s32 1, %s12
  %s15 = scalar_select 0, %s14, %s12
  $region1: #{tpu_custom_call.1} parent=0
    #allocation2 [shape = 'u8[131072]{0}', space=vmem, size = 0x20000, scoped, tag = 'output window, operand 0']
    #allocation3 [shape = 's32[2]{0}', space=sflag, size = 0x8, scoped, tag = 'scoped memory for tpu_custom_call.1']
    %16 = vsyncpa [#allocation3], 0
    %s17 = scalar_lea.sflag [#allocation3], 1
    %18 = vsyncpa %s17, 0
    loop: start=0, step=1, limit=6
    $region2: #{tpu_custom_call.1} parent=1 // loop_pre_header
      _
    $region3: #{tpu_custom_call.1} parent=1 // loop_header
      %s20 = sphi 0, %s24
      %p21 = scmp.ge.s32.totalorder %s20, 6
      %s30 = sphi 0, %s32
      %s33 = sphi 0, %s30
      %s34 = sphi 0, %s33
      %s50 = sphi 0, %s34
      %s54 = sphi 0, %s54
      %s56 = sphi 0, %s54
      %s57 = sphi 0, %s56
      %s71 = sphi 0, %s57
      %s75 = sphi 0, %s75
      %s77 = sphi 0, %s75
      %s78 = sphi 0, %s77
      %s92 = sphi 0, %s78
      %s96 = sphi 0, %s96
      %s98 = sphi 0, %s96
      %s99 = sphi 0, %s98
      %s113 = sphi 0, %s99
      %s117 = sphi 0, %s117
      %s119 = sphi 0, %s117
      %s120 = sphi 0, %s119
      %s134 = sphi 0, %s120
      %s138 = sphi 0, %s138
      %s140 = sphi 0, %s138
      %s141 = sphi 0, %s140
      %s155 = sphi 0, %s141
      %s159 = sphi 0, %s159
      %s161 = sphi 0, %s159
      %s162 = sphi 0, %s161
      %s176 = sphi 0, %s162
      %s180 = sphi 0, %s180
      %s182 = sphi 0, %s180
      %s183 = sphi 0, %s182
      %s197 = sphi 0, %s183
      %s201 = sphi 0, %s201
      %s203 = sphi 0, %s201
      %s204 = sphi 0, %s203
      %s218 = sphi 0, %s204
      %s222 = sphi 0, %s222
      %s224 = sphi 0, %s222
      %s225 = sphi 0, %s224
      %s239 = sphi 0, %s225
      %s243 = sphi 0, %s243
      %s245 = sphi 0, %s243
      %s246 = sphi 0, %s245
      %s260 = sphi 0, %s246
      %s266 = sphi 0, %s268
      %s269 = sphi 0, %s266
      %s270 = sphi 0, %s269
      %s286 = sphi 0, %s270
    $region4: #{tpu_custom_call.1} parent=1 // loop_header_branch
      %23 = sbr.rel (%p21) target = $region8
    $region5: #{tpu_custom_call.1} parent=1 // loop_body
      %s25 = ssub.s32 %s20, 1
      %s26 = ssub.s32 %s20, 2
      %s27 = sadd.s32 %s20, 1
      %s28 = ssub.s32 %s20, %s27
      %p29 = scmp.eq.s32.totalorder %s28, 0
      %s31 = sadd.s32 %s30, 1
      %s32 = scalar_select %p29, %s30, %s31
      %p35 = pneg %p29
      %p36 = scmp.eq.s32.totalorder %s20, 3
      %p37 = por %p35, %p36
      %p38 = scmp.ne.s32.totalorder %s30, %s33
      %p39 = scmp.eq.s32.totalorder %s20, 0
      %p40 = por %p38, %p39
      %p41 = scmp.ne.s32.totalorder %s30, %s33
      %p42 = scmp.eq.s32.totalorder %s25, 3
      %p43 = por %p41, %p42
      %p44 = scmp.ne.s32.totalorder %s33, %s34
      %p45 = scmp.eq.s32.totalorder %s25, 0
      %p46 = por %p44, %p45
      %p47 = scmp.ne.s32.totalorder %s33, %s34
      %p48 = scmp.eq.s32.totalorder %s26, 3
      %p49 = por %p47, %p48
      %p51 = scmp.ne.s32.totalorder %s34, %s50
      %p52 = scmp.eq.s32.totalorder %s26, 0
      %p53 = por %p51, %p52
      %s55 = sadd.s32 %s54, 1
      %p58 = scmp.eq.s32.totalorder %s20, 3
      %p59 = scmp.ne.s32.totalorder %s54, %s56
      %p60 = scmp.eq.s32.totalorder %s20, 0
      %p61 = por %p59, %p60
      %p62 = scmp.ne.s32.totalorder %s54, %s56
      %p63 = scmp.eq.s32.totalorder %s25, 3
      %p64 = por %p62, %p63
      %p65 = scmp.ne.s32.totalorder %s56, %s57
      %p66 = scmp.eq.s32.totalorder %s25, 0
      %p67 = por %p65, %p66
      %p68 = scmp.ne.s32.totalorder %s56, %s57
      %p69 = scmp.eq.s32.totalorder %s26, 3
      %p70 = por %p68, %p69
      %p72 = scmp.ne.s32.totalorder %s57, %s71
      %p73 = scmp.eq.s32.totalorder %s26, 0
      %p74 = por %p72, %p73
      %s76 = sadd.s32 %s75, 1
      %p79 = scmp.eq.s32.totalorder %s20, 3
      %p80 = scmp.ne.s32.totalorder %s75, %s77
      %p81 = scmp.eq.s32.totalorder %s20, 0
      %p82 = por %p80, %p81
      %p83 = scmp.ne.s32.totalorder %s75, %s77
      %p84 = scmp.eq.s32.totalorder %s25, 3
      %p85 = por %p83, %p84
      %p86 = scmp.ne.s32.totalorder %s77, %s78
      %p87 = scmp.eq.s32.totalorder %s25, 0
      %p88 = por %p86, %p87
      %p89 = scmp.ne.s32.totalorder %s77, %s78
      %p90 = scmp.eq.s32.totalorder %s26, 3
      %p91 = por %p89, %p90
      %p93 = scmp.ne.s32.totalorder %s78, %s92
      %p94 = scmp.eq.s32.totalorder %s26, 0
      %p95 = por %p93, %p94
      %s97 = sadd.s32 %s96, 1
      %p100 = scmp.eq.s32.totalorder %s20, 3
      %p101 = scmp.ne.s32.totalorder %s96, %s98
      %p102 = scmp.eq.s32.totalorder %s20, 0
      %p103 = por %p101, %p102
      %p104 = scmp.ne.s32.totalorder %s96, %s98
      %p105 = scmp.eq.s32.totalorder %s25, 3
      %p106 = por %p104, %p105
      %p107 = scmp.ne.s32.totalorder %s98, %s99
      %p108 = scmp.eq.s32.totalorder %s25, 0
      %p109 = por %p107, %p108
      %p110 = scmp.ne.s32.totalorder %s98, %s99
      %p111 = scmp.eq.s32.totalorder %s26, 3
      %p112 = por %p110, %p111
      %p114 = scmp.ne.s32.totalorder %s99, %s113
      %p115 = scmp.eq.s32.totalorder %s26, 0
      %p116 = por %p114, %p115
      %s118 = sadd.s32 %s117, 1
      %p121 = scmp.eq.s32.totalorder %s20, 3
      %p122 = scmp.ne.s32.totalorder %s117, %s119
      %p123 = scmp.eq.s32.totalorder %s20, 0
      %p124 = por %p122, %p123
      %p125 = scmp.ne.s32.totalorder %s117, %s119
      %p126 = scmp.eq.s32.totalorder %s25, 3
      %p127 = por %p125, %p126
      %p128 = scmp.ne.s32.totalorder %s119, %s120
      %p129 = scmp.eq.s32.totalorder %s25, 0
      %p130 = por %p128, %p129
      %p131 = scmp.ne.s32.totalorder %s119, %s120
      %p132 = scmp.eq.s32.totalorder %s26, 3
      %p133 = por %p131, %p132
      %p135 = scmp.ne.s32.totalorder %s120, %s134
      %p136 = scmp.eq.s32.totalorder %s26, 0
      %p137 = por %p135, %p136
      %s139 = sadd.s32 %s138, 1
      %p142 = scmp.eq.s32.totalorder %s20, 3
      %p143 = scmp.ne.s32.totalorder %s138, %s140
      %p144 = scmp.eq.s32.totalorder %s20, 0
      %p145 = por %p143, %p144
      %p146 = scmp.ne.s32.totalorder %s138, %s140
      %p147 = scmp.eq.s32.totalorder %s25, 3
      %p148 = por %p146, %p147
      %p149 = scmp.ne.s32.totalorder %s140, %s141
      %p150 = scmp.eq.s32.totalorder %s25, 0
      %p151 = por %p149, %p150
      %p152 = scmp.ne.s32.totalorder %s140, %s141
      %p153 = scmp.eq.s32.totalorder %s26, 3
      %p154 = por %p152, %p153
      %p156 = scmp.ne.s32.totalorder %s141, %s155
      %p157 = scmp.eq.s32.totalorder %s26, 0
      %p158 = por %p156, %p157
      %s160 = sadd.s32 %s159, 1
      %p163 = scmp.eq.s32.totalorder %s20, 3
      %p164 = scmp.ne.s32.totalorder %s159, %s161
      %p165 = scmp.eq.s32.totalorder %s20, 0
      %p166 = por %p164, %p165
      %p167 = scmp.ne.s32.totalorder %s159, %s161
      %p168 = scmp.eq.s32.totalorder %s25, 3
      %p169 = por %p167, %p168
      %p170 = scmp.ne.s32.totalorder %s161, %s162
      %p171 = scmp.eq.s32.totalorder %s25, 0
      %p172 = por %p170, %p171
      %p173 = scmp.ne.s32.totalorder %s161, %s162
      %p174 = scmp.eq.s32.totalorder %s26, 3
      %p175 = por %p173, %p174
      %p177 = scmp.ne.s32.totalorder %s162, %s176
      %p178 = scmp.eq.s32.totalorder %s26, 0
      %p179 = por %p177, %p178
      %s181 = sadd.s32 %s180, 1
      %p184 = scmp.eq.s32.totalorder %s20, 3
      %p185 = scmp.ne.s32.totalorder %s180, %s182
      %p186 = scmp.eq.s32.totalorder %s20, 0
      %p187 = por %p185, %p186
      %p188 = scmp.ne.s32.totalorder %s180, %s182
      %p189 = scmp.eq.s32.totalorder %s25, 3
      %p190 = por %p188, %p189
      %p191 = scmp.ne.s32.totalorder %s182, %s183
      %p192 = scmp.eq.s32.totalorder %s25, 0
      %p193 = por %p191, %p192
      %p194 = scmp.ne.s32.totalorder %s182, %s183
      %p195 = scmp.eq.s32.totalorder %s26, 3
      %p196 = por %p194, %p195
      %p198 = scmp.ne.s32.totalorder %s183, %s197
      %p199 = scmp.eq.s32.totalorder %s26, 0
      %p200 = por %p198, %p199
      %s202 = sadd.s32 %s201, 1
      %p205 = scmp.eq.s32.totalorder %s20, 3
      %p206 = scmp.ne.s32.totalorder %s201, %s203
      %p207 = scmp.eq.s32.totalorder %s20, 0
      %p208 = por %p206, %p207
      %p209 = scmp.ne.s32.totalorder %s201, %s203
      %p210 = scmp.eq.s32.totalorder %s25, 3
      %p211 = por %p209, %p210
      %p212 = scmp.ne.s32.totalorder %s203, %s204
      %p213 = scmp.eq.s32.totalorder %s25, 0
      %p214 = por %p212, %p213
      %p215 = scmp.ne.s32.totalorder %s203, %s204
      %p216 = scmp.eq.s32.totalorder %s26, 3
      %p217 = por %p215, %p216
      %p219 = scmp.ne.s32.totalorder %s204, %s218
      %p220 = scmp.eq.s32.totalorder %s26, 0
      %p221 = por %p219, %p220
      %s223 = sadd.s32 %s222, 1
      %p226 = scmp.eq.s32.totalorder %s20, 3
      %p227 = scmp.ne.s32.totalorder %s222, %s224
      %p228 = scmp.eq.s32.totalorder %s20, 0
      %p229 = por %p227, %p228
      %p230 = scmp.ne.s32.totalorder %s222, %s224
      %p231 = scmp.eq.s32.totalorder %s25, 3
      %p232 = por %p230, %p231
      %p233 = scmp.ne.s32.totalorder %s224, %s225
      %p234 = scmp.eq.s32.totalorder %s25, 0
      %p235 = por %p233, %p234
      %p236 = scmp.ne.s32.totalorder %s224, %s225
      %p237 = scmp.eq.s32.totalorder %s26, 3
      %p238 = por %p236, %p237
      %p240 = scmp.ne.s32.totalorder %s225, %s239
      %p241 = scmp.eq.s32.totalorder %s26, 0
      %p242 = por %p240, %p241
      %s244 = sadd.s32 %s243, 1
      %p247 = scmp.eq.s32.totalorder %s20, 3
      %p248 = scmp.ne.s32.totalorder %s243, %s245
      %p249 = scmp.eq.s32.totalorder %s20, 0
      %p250 = por %p248, %p249
      %p251 = scmp.ne.s32.totalorder %s243, %s245
      %p252 = scmp.eq.s32.totalorder %s25, 3
      %p253 = por %p251, %p252
      %p254 = scmp.ne.s32.totalorder %s245, %s246
      %p255 = scmp.eq.s32.totalorder %s25, 0
      %p256 = por %p254, %p255
      %p257 = scmp.ne.s32.totalorder %s245, %s246
      %p258 = scmp.eq.s32.totalorder %s26, 3
      %p259 = por %p257, %p258
      %p261 = scmp.ne.s32.totalorder %s246, %s260
      %p262 = scmp.eq.s32.totalorder %s26, 0
      %p263 = por %p261, %p262
      %s264 = ssub.s32 %s20, %s27
      %p265 = scmp.eq.s32.totalorder %s264, 0
      %s267 = sadd.s32 %s266, 1
      %s268 = scalar_select %p265, %s266, %s267
      %p271 = pneg %p265
      %p272 = scmp.eq.s32.totalorder %s20, 3
      %p273 = por %p271, %p272
      %p274 = scmp.ne.s32.totalorder %s266, %s269
      %p275 = scmp.eq.s32.totalorder %s20, 0
      %p276 = por %p274, %p275
      %p277 = scmp.ne.s32.totalorder %s266, %s269
      %p278 = scmp.eq.s32.totalorder %s25, 3
      %p279 = por %p277, %p278
      %p280 = scmp.ne.s32.totalorder %s269, %s270
      %p281 = scmp.eq.s32.totalorder %s25, 0
      %p282 = por %p280, %p281
      %p283 = scmp.ne.s32.totalorder %s269, %s270
      %p284 = scmp.eq.s32.totalorder %s26, 3
      %p285 = por %p283, %p284
      %p287 = scmp.ne.s32.totalorder %s270, %s286
      %p288 = scmp.eq.s32.totalorder %s26, 0
      %p289 = por %p287, %p288
      %p290 = scmp.le.s32.totalorder 1, %s20
      %p291 = scmp.lt.s32.totalorder %s20, 5
      %p292 = pnand %p290, %p291
      %p293 = pneg %p292
      // Predicated region
      $region9: #{tpu_custom_call.1} parent=5 // pred_check
        _
      $region10: #{tpu_custom_call.1} parent=5 // pred_check_branch
        %295 = sbr.rel (%p292) target = $region12
      $region11: #{tpu_custom_call.1} parent=5 // pred_region
        %s296 = ssub.s32 %s20, 1
        // Predicated region
        $region13: #{tpu_custom_call.1} parent=11 // pred_check
          %p297 = pneg %p67
        $region14: #{tpu_custom_call.1} parent=11 // pred_check_branch
          %299 = sbr.rel (%p297) target = $region16
        $region15: #{tpu_custom_call.1} parent=11 // pred_region
          _
        $region16: #{tpu_custom_call.1} parent=11 // pred_fallthru
          _
        // Predicated region
        $region17: #{tpu_custom_call.1} parent=11 // pred_check
          %p300 = pneg %p88
        $region18: #{tpu_custom_call.1} parent=11 // pred_check_branch
          %302 = sbr.rel (%p300) target = $region20
        $region19: #{tpu_custom_call.1} parent=11 // pred_region
          _
        $region20: #{tpu_custom_call.1} parent=11 // pred_fallthru
          _
        // Predicated region
        $region21: #{tpu_custom_call.1} parent=11 // pred_check
          %p303 = pneg %p109
        $region22: #{tpu_custom_call.1} parent=11 // pred_check_branch
          %305 = sbr.rel (%p303) target = $region24
        $region23: #{tpu_custom_call.1} parent=11 // pred_region
          _
        $region24: #{tpu_custom_call.1} parent=11 // pred_fallthru
          _
        // Predicated region
        $region25: #{tpu_custom_call.1} parent=11 // pred_check
          %p306 = pneg %p130
        $region26: #{tpu_custom_call.1} parent=11 // pred_check_branch
          %308 = sbr.rel (%p306) target = $region28
        $region27: #{tpu_custom_call.1} parent=11 // pred_region
          _
        $region28: #{tpu_custom_call.1} parent=11 // pred_fallthru
          _
        // Predicated region
        $region29: #{tpu_custom_call.1} parent=11 // pred_check
          %p309 = pneg %p151
        $region30: #{tpu_custom_call.1} parent=11 // pred_check_branch
          %311 = sbr.rel (%p309) target = $region32
        $region31: #{tpu_custom_call.1} parent=11 // pred_region
          _
        $region32: #{tpu_custom_call.1} parent=11 // pred_fallthru
          _
        // Predicated region
        $region33: #{tpu_custom_call.1} parent=11 // pred_check
          %p312 = pneg %p172
        $region34: #{tpu_custom_call.1} parent=11 // pred_check_branch
          %314 = sbr.rel (%p312) target = $region36
        $region35: #{tpu_custom_call.1} parent=11 // pred_region
          _
        $region36: #{tpu_custom_call.1} parent=11 // pred_fallthru
          _
        // Predicated region
        $region37: #{tpu_custom_call.1} parent=11 // pred_check
          %p315 = pneg %p193
        $region38: #{tpu_custom_call.1} parent=11 // pred_check_branch
          %317 = sbr.rel (%p315) target = $region40
        $region39: #{tpu_custom_call.1} parent=11 // pred_region
          _
        $region40: #{tpu_custom_call.1} parent=11 // pred_fallthru
          _
        // Predicated region
        $region41: #{tpu_custom_call.1} parent=11 // pred_check
          %p318 = pneg %p214
        $region42: #{tpu_custom_call.1} parent=11 // pred_check_branch
          %320 = sbr.rel (%p318) target = $region44
        $region43: #{tpu_custom_call.1} parent=11 // pred_region
          _
        $region44: #{tpu_custom_call.1} parent=11 // pred_fallthru
          _
        // Predicated region
        $region45: #{tpu_custom_call.1} parent=11 // pred_check
          %p321 = pneg %p235
        $region46: #{tpu_custom_call.1} parent=11 // pred_check_branch
          %323 = sbr.rel (%p321) target = $region48
        $region47: #{tpu_custom_call.1} parent=11 // pred_region
          _
        $region48: #{tpu_custom_call.1} parent=11 // pred_fallthru
          _
        // Predicated region
        $region49: #{tpu_custom_call.1} parent=11 // pred_check
          %p324 = pneg %p256
        $region50: #{tpu_custom_call.1} parent=11 // pred_check_branch
          %326 = sbr.rel (%p324) target = $region52
        $region51: #{tpu_custom_call.1} parent=11 // pred_region
          _
        $region52: #{tpu_custom_call.1} parent=11 // pred_fallthru
          _
      $region12: #{tpu_custom_call.1} parent=5 // pred_fallthru
        _
      %p327 = scmp.lt.s32.totalorder %s20, 4
      // Predicated region
      $region53: #{tpu_custom_call.1} parent=5 // pred_check
        %p328 = pneg %p327
      $region54: #{tpu_custom_call.1} parent=5 // pred_check_branch
        %330 = sbr.rel (%p328) target = $region56
      $region55: #{tpu_custom_call.1} parent=5 // pred_region
        // Predicated region
        $region57: #{tpu_custom_call.1} parent=55 // pred_check
          %p331 = pneg %p40
        $region58: #{tpu_custom_call.1} parent=55 // pred_check_branch
          %333 = sbr.rel (%p331) target = $region60
        $region59: #{tpu_custom_call.1} parent=55 // pred_region
          %s334 = smul.u32 32, %s20
          %p335 = scmp.lt.s32.totalorder %s334, 127
          %s336 = scalar_select %p335, %s334, 127
          %s337 = smul.addr %s336, 4
          %s338 = scalar_lea.vmem %s0, %s337
          %s339 = smul.u32 32, %s20
        $region60: #{tpu_custom_call.1} parent=55 // pred_fallthru
          _
      $region56: #{tpu_custom_call.1} parent=5 // pred_fallthru
        _
      %p340 = scmp.le.s32.totalorder 1, %s20
      %p341 = scmp.lt.s32.totalorder %s20, 5
      %p342 = pnand %p340, %p341
      %p343 = pneg %p342
      // Predicated region
      $region61: #{tpu_custom_call.1} parent=5 // pred_check
        _
      $region62: #{tpu_custom_call.1} parent=5 // pred_check_branch
        %345 = sbr.rel (%p342) target = $region64
      $region63: #{tpu_custom_call.1} parent=5 // pred_region
        %s346 = ssub.s32 %s20, 1
        %s347 = smul.u32 32, %s25
        %p348 = scmp.lt.s32.totalorder %s347, 127
        %s349 = scalar_select %p348, %s347, 127
        %s350 = smul.addr %s349, 4
        %s351 = scalar_lea.vmem %s0, %s350
        %p352 = pneg %p46
        %p353 = pneg %p43
        %p354 = pneg %p67
        %p355 = pneg %p64
        %p356 = pneg %p88
        %p357 = pneg %p85
        %p358 = pneg %p109
        %p359 = pneg %p106
        %p360 = pneg %p130
        %p361 = pneg %p127
        %p362 = pneg %p151
        %p363 = pneg %p148
        %p364 = pneg %p172
        %p365 = pneg %p169
        %p366 = pneg %p193
        %p367 = pneg %p190
        %p368 = pneg %p214
        %p369 = pneg %p211
        %p370 = pneg %p235
        %p371 = pneg %p232
        %p372 = pneg %p256
        %p373 = pneg %p253
        %p374 = pneg %p282
        %p375 = pneg %p279
        %s376 = sand.u32 %s269, 1
        %s377 = scalar_lea.sflag [#allocation3], %s376
        %s378 = sand.u32 %s269, 1
        %s379 = smul.addr %s378, 128
        %s380 = scalar_lea.vmem [#allocation2], %s379
        %s381 = smul.u32 32, %s25
        %p382 = scmp.lt.s32.totalorder %s381, 127
        %s383 = scalar_select %p382, %s381, 127
        %s384 = smul.addr %s383, 4
        %s385 = scalar_lea.vmem %s0, %s384
        %s386 = smul.u32 32, %s25
        %s387 = smul.u32 32, %s25
        %v389 = vld [vmem:[%s385] sm:$0xf]
        %v390 = vld [vmem:[%s385 + $0x4] sm:$0xf]
        %v391 = vld [vmem:[%s385 + $0x8] sm:$0xf]
        %v392 = vld [vmem:[%s385 + $0xc] sm:$0xf]
        %v393 = vld [vmem:[%s385 + $0x10] sm:$0xf]
        %v394 = vld [vmem:[%s385 + $0x14] sm:$0xf]
        %v395 = vld [vmem:[%s385 + $0x18] sm:$0xf]
        %v396 = vld [vmem:[%s385 + $0x1c] sm:$0xf]
        %v397 = vld [vmem:[%s385 + $0x20] sm:$0xf]
        %v398 = vld [vmem:[%s385 + $0x24] sm:$0xf]
        %v399 = vld [vmem:[%s385 + $0x28] sm:$0xf]
        %v400 = vld [vmem:[%s385 + $0x2c] sm:$0xf]
        %v401 = vld [vmem:[%s385 + $0x30] sm:$0xf]
        %v402 = vld [vmem:[%s385 + $0x34] sm:$0xf]
        %v403 = vld [vmem:[%s385 + $0x38] sm:$0xf]
        %v404 = vld [vmem:[%s385 + $0x3c] sm:$0xf]
        %v405 = vld [vmem:[%s385 + $0x40] sm:$0xf]
        %v406 = vld [vmem:[%s385 + $0x44] sm:$0xf]
        %v407 = vld [vmem:[%s385 + $0x48] sm:$0xf]
        %v408 = vld [vmem:[%s385 + $0x4c] sm:$0xf]
        %v409 = vld [vmem:[%s385 + $0x50] sm:$0xf]
        %v410 = vld [vmem:[%s385 + $0x54] sm:$0xf]
        %v411 = vld [vmem:[%s385 + $0x58] sm:$0xf]
        %v412 = vld [vmem:[%s385 + $0x5c] sm:$0xf]
        %v413 = vld [vmem:[%s385 + $0x60] sm:$0xf]
        %v414 = vld [vmem:[%s385 + $0x64] sm:$0xf]
        %v415 = vld [vmem:[%s385 + $0x68] sm:$0xf]
        %v416 = vld [vmem:[%s385 + $0x6c] sm:$0xf]
        %v417 = vld [vmem:[%s385 + $0x70] sm:$0xf]
        %v418 = vld [vmem:[%s385 + $0x74] sm:$0xf]
        %v419 = vld [vmem:[%s385 + $0x78] sm:$0xf]
        %v420 = vld [vmem:[%s385 + $0x7c] sm:$0xf]
        %v421 = vld [vmem:[%s1] sm:$0x3]
        %v422 = vld [vmem:[%s2] sm:$0x1]
        %v455 = vunpack.c.l.b16 %v389
        %v456 = vunpack.c.l.b16 %v390
        %v457 = vunpack.c.l.b16 %v391
        %v458 = vunpack.c.l.b16 %v392
        %v459 = vunpack.c.l.b16 %v393
        %v460 = vunpack.c.l.b16 %v394
        %v461 = vunpack.c.l.b16 %v395
        %v462 = vunpack.c.l.b16 %v396
        %v463 = vunpack.c.l.b16 %v397
        %v464 = vunpack.c.l.b16 %v398
        %v465 = vunpack.c.l.b16 %v399
        %v466 = vunpack.c.l.b16 %v400
        %v467 = vunpack.c.l.b16 %v401
        %v468 = vunpack.c.l.b16 %v402
        %v469 = vunpack.c.l.b16 %v403
        %v470 = vunpack.c.l.b16 %v404
        %v471 = vunpack.c.l.b16 %v405
        %v472 = vunpack.c.l.b16 %v406
        %v473 = vunpack.c.l.b16 %v407
        %v474 = vunpack.c.l.b16 %v408
        %v475 = vunpack.c.l.b16 %v409
        %v476 = vunpack.c.l.b16 %v410
        %v477 = vunpack.c.l.b16 %v411
        %v478 = vunpack.c.l.b16 %v412
        %v479 = vunpack.c.l.b16 %v413
        %v480 = vunpack.c.l.b16 %v414
        %v481 = vunpack.c.l.b16 %v415
        %v482 = vunpack.c.l.b16 %v416
        %v483 = vunpack.c.l.b16 %v417
        %v484 = vunpack.c.l.b16 %v418
        %v485 = vunpack.c.l.b16 %v419
        %v486 = vunpack.c.l.b16 %v420
        %v487 = vpack.c.b16 %v456, %v455
        %v488 = vpack.c.b16 %v458, %v457
        %v489 = vpack.c.b16 %v460, %v459
        %v490 = vpack.c.b16 %v462, %v461
        %v491 = vpack.c.b16 %v464, %v463
        %v492 = vpack.c.b16 %v466, %v465
        %v493 = vpack.c.b16 %v468, %v467
        %v494 = vpack.c.b16 %v470, %v469
        %v495 = vpack.c.b16 %v472, %v471
        %v496 = vpack.c.b16 %v474, %v473
        %v497 = vpack.c.b16 %v476, %v475
        %v498 = vpack.c.b16 %v478, %v477
        %v499 = vpack.c.b16 %v480, %v479
        %v500 = vpack.c.b16 %v482, %v481
        %v501 = vpack.c.b16 %v484, %v483
        %v502 = vpack.c.b16 %v486, %v485
        %vm503 = vcmask 31744
        %v505 = vsel %vm503, %v487, 0
        %v508 = vsel %vm503, %v488, 0
        %v511 = vsel %vm503, %v489, 0
        %v514 = vsel %vm503, %v490, 0
        %v517 = vsel %vm503, %v491, 0
        %v520 = vsel %vm503, %v492, 0
        %v523 = vsel %vm503, %v493, 0
        %v526 = vsel %vm503, %v494, 0
        %v529 = vsel %vm503, %v495, 0
        %v532 = vsel %vm503, %v496, 0
        %v535 = vsel %vm503, %v497, 0
        %v538 = vsel %vm503, %v498, 0
        %v541 = vsel %vm503, %v499, 0
        %v544 = vsel %vm503, %v500, 0
        %v547 = vsel %vm503, %v501, 0
        %v550 = vsel %vm503, %v502, 0
        %vm552 = vcmask 1041408
        %v554 = vsel %vm552, %v421, 0
        %556 = vmatprep.subr.bf16.mxu0 0
        %557 = vmatpush1.bf16.msra.mxu0 %v554
        %558 = vmatprep.subr.bf16.mxu0 0
        %559 = vmatpush1.bf16.msra.mxu0 0
        %560 = vmatprep.subr.bf16.mxu0 0
        %561 = vmatpush1.bf16.msra.mxu0 0
        %562 = vmatprep.subr.bf16.mxu0 0
        %563 = vmatpush1.bf16.msra.mxu0 0
        %564 = vmatprep.subr.bf16.mxu0 0
        %565 = vmatpush1.bf16.msra.mxu0 0
        %566 = vmatprep.subr.bf16.mxu0 0
        %567 = vmatpush1.bf16.msra.mxu0 0
        %568 = vmatprep.subr.bf16.mxu0 0
        %569 = vmatpush1.bf16.msra.mxu0 0
        %570 = vmatprep.subr.bf16.mxu0 0
        %571 = vmatpush1.bf16.msra.mxu0 0
        %572 = vmatprep.subr.bf16.mxu0 0
        %573 = vmatpush1.bf16.msra.mxu0 0
        %574 = vmatprep.subr.bf16.mxu0 0
        %575 = vmatpush1.bf16.msra.mxu0 0
        %576 = vmatprep.subr.bf16.mxu0 0
        %577 = vmatpush1.bf16.msra.mxu0 0
        %578 = vmatprep.subr.bf16.mxu0 0
        %579 = vmatpush1.bf16.msra.mxu0 0
        %580 = vmatprep.subr.bf16.mxu0 0
        %581 = vmatpush1.bf16.msra.mxu0 0
        %582 = vmatprep.subr.bf16.mxu0 0
        %583 = vmatpush1.bf16.msra.mxu0 0
        %584 = vmatprep.subr.bf16.mxu0 0
        %585 = vmatpush1.bf16.msra.mxu0 0
        %586 = vmatprep.subr.bf16.mxu0 0
        %587 = vmatpush1.bf16.msra.mxu0 0
        %588 = vmatprep.mubr.bf16.mxu0 0
        %589 = vmatmul.mubr.bf16.gmra.mrb[0].mxu0 %v505
        %v590 = vpop.f32.mrb[0].mxu0
        %v591 = vadd.f32 0.0, %v590
        %v592 = vpop.f32.mrb[0].mxu0
        %v593 = vpop.f32.mrb[0].mxu0
        %v594 = vadd.f32 0.0, %v593
        %v595 = vpop.f32.mrb[0].mxu0
        %596 = vmatprep.mubr.bf16.mxu0 0
        %597 = vmatmul.mubr.bf16.gmra.mrb[0].mxu0 %v508
        %v598 = vpop.f32.mrb[0].mxu0
        %v599 = vadd.f32 0.0, %v598
        %v600 = vpop.f32.mrb[0].mxu0
        %v601 = vpop.f32.mrb[0].mxu0
        %v602 = vadd.f32 0.0, %v601
        %v603 = vpop.f32.mrb[0].mxu0
        %604 = vmatprep.mubr.bf16.mxu0 0
        %605 = vmatmul.mubr.bf16.gmra.mrb[0].mxu0 %v511
        %v606 = vpop.f32.mrb[0].mxu0
        %v607 = vadd.f32 0.0, %v606
        %v608 = vpop.f32.mrb[0].mxu0
        %v609 = vpop.f32.mrb[0].mxu0
        %v610 = vadd.f32 0.0, %v609
        %v611 = vpop.f32.mrb[0].mxu0
        %612 = vmatprep.mubr.bf16.mxu0 0
        %613 = vmatmul.mubr.bf16.gmra.mrb[0].mxu0 %v514
        %v614 = vpop.f32.mrb[0].mxu0
        %v615 = vadd.f32 0.0, %v614
        %v616 = vpop.f32.mrb[0].mxu0
        %v617 = vpop.f32.mrb[0].mxu0
        %v618 = vadd.f32 0.0, %v617
        %v619 = vpop.f32.mrb[0].mxu0
        %620 = vmatprep.mubr.bf16.mxu0 0
        %621 = vmatmul.mubr.bf16.gmra.mrb[0].mxu0 %v517
        %v622 = vpop.f32.mrb[0].mxu0
        %v623 = vadd.f32 0.0, %v622
        %v624 = vpop.f32.mrb[0].mxu0
        %v625 = vpop.f32.mrb[0].mxu0
        %v626 = vadd.f32 0.0, %v625
        %v627 = vpop.f32.mrb[0].mxu0
        %628 = vmatprep.mubr.bf16.mxu0 0
        %629 = vmatmul.mubr.bf16.gmra.mrb[0].mxu0 %v520
        %v630 = vpop.f32.mrb[0].mxu0
        %v631 = vadd.f32 0.0, %v630
        %v632 = vpop.f32.mrb[0].mxu0
        %v633 = vpop.f32.mrb[0].mxu0
        %v634 = vadd.f32 0.0, %v633
        %v635 = vpop.f32.mrb[0].mxu0
        %636 = vmatprep.mubr.bf16.mxu0 0
        %637 = vmatmul.mubr.bf16.gmra.mrb[0].mxu0 %v523
        %v638 = vpop.f32.mrb[0].mxu0
        %v639 = vadd.f32 0.0, %v638
        %v640 = vpop.f32.mrb[0].mxu0
        %v641 = vpop.f32.mrb[0].mxu0
        %v642 = vadd.f32 0.0, %v641
        %v643 = vpop.f32.mrb[0].mxu0
        %644 = vmatprep.mubr.bf16.mxu0 0
        %645 = vmatmul.mubr.bf16.gmra.mrb[0].mxu0 %v526
        %v646 = vpop.f32.mrb[0].mxu0
        %v647 = vadd.f32 0.0, %v646
        %v648 = vpop.f32.mrb[0].mxu0
        %v649 = vpop.f32.mrb[0].mxu0
        %v650 = vadd.f32 0.0, %v649
        %v651 = vpop.f32.mrb[0].mxu0
        %652 = vmatprep.mubr.bf16.mxu0 0
        %653 = vmatmul.mubr.bf16.gmra.mrb[0].mxu0 %v529
        %v654 = vpop.f32.mrb[0].mxu0
        %v655 = vadd.f32 0.0, %v654
        %v656 = vpop.f32.mrb[0].mxu0
        %v657 = vpop.f32.mrb[0].mxu0
        %v658 = vadd.f32 0.0, %v657
        %v659 = vpop.f32.mrb[0].mxu0
        %660 = vmatprep.mubr.bf16.mxu0 0
        %661 = vmatmul.mubr.bf16.gmra.mrb[0].mxu0 %v532
        %v662 = vpop.f32.mrb[0].mxu0
        %v663 = vadd.f32 0.0, %v662
        %v664 = vpop.f32.mrb[0].mxu0
        %v665 = vpop.f32.mrb[0].mxu0
        %v666 = vadd.f32 0.0, %v665
        %v667 = vpop.f32.mrb[0].mxu0
        %668 = vmatprep.mubr.bf16.mxu0 0
        %669 = vmatmul.mubr.bf16.gmra.mrb[0].mxu0 %v535
        %v670 = vpop.f32.mrb[0].mxu0
        %v671 = vadd.f32 0.0, %v670
        %v672 = vpop.f32.mrb[0].mxu0
        %v673 = vpop.f32.mrb[0].mxu0
        %v674 = vadd.f32 0.0, %v673
        %v675 = vpop.f32.mrb[0].mxu0
        %676 = vmatprep.mubr.bf16.mxu0 0
        %677 = vmatmul.mubr.bf16.gmra.mrb[0].mxu0 %v538
        %v678 = vpop.f32.mrb[0].mxu0
        %v679 = vadd.f32 0.0, %v678
        %v680 = vpop.f32.mrb[0].mxu0
        %v681 = vpop.f32.mrb[0].mxu0
        %v682 = vadd.f32 0.0, %v681
        %v683 = vpop.f32.mrb[0].mxu0
        %684 = vmatprep.mubr.bf16.mxu0 0
        %685 = vmatmul.mubr.bf16.gmra.mrb[0].mxu0 %v541
        %v686 = vpop.f32.mrb[0].mxu0
        %v687 = vadd.f32 0.0, %v686
        %v688 = vpop.f32.mrb[0].mxu0
        %v689 = vpop.f32.mrb[0].mxu0
        %v690 = vadd.f32 0.0, %v689
        %v691 = vpop.f32.mrb[0].mxu0
        %692 = vmatprep.mubr.bf16.mxu0 0
        %693 = vmatmul.mubr.bf16.gmra.mrb[0].mxu0 %v544
        %v694 = vpop.f32.mrb[0].mxu0
        %v695 = vadd.f32 0.0, %v694
        %v696 = vpop.f32.mrb[0].mxu0
        %v697 = vpop.f32.mrb[0].mxu0
        %v698 = vadd.f32 0.0, %v697
        %v699 = vpop.f32.mrb[0].mxu0
        %700 = vmatprep.mubr.bf16.mxu0 0
        %701 = vmatmul.mubr.bf16.gmra.mrb[0].mxu0 %v547
        %v702 = vpop.f32.mrb[0].mxu0
        %v703 = vadd.f32 0.0, %v702
        %v704 = vpop.f32.mrb[0].mxu0
        %v705 = vpop.f32.mrb[0].mxu0
        %v706 = vadd.f32 0.0, %v705
        %v707 = vpop.f32.mrb[0].mxu0
        %708 = vmatprep.mubr.bf16.mxu0 0
        %709 = vmatmul.mubr.bf16.gmra.mrb[0].mxu0 %v550
        %v710 = vpop.f32.mrb[0].mxu0
        %v711 = vadd.f32 0.0, %v710
        %v712 = vpop.f32.mrb[0].mxu0
        %v713 = vpop.f32.mrb[0].mxu0
        %v714 = vadd.f32 0.0, %v713
        %v715 = vpop.f32.mrb[0].mxu0
        %716 = vdwg.mxu0
        %v717 = vpack.c.bf16 %v594, %v591
        %v718 = vpack.c.bf16 %v602, %v599
        %v719 = vpack.c.bf16 %v610, %v607
        %v720 = vpack.c.bf16 %v618, %v615
        %v721 = vpack.c.bf16 %v626, %v623
        %v722 = vpack.c.bf16 %v634, %v631
        %v723 = vpack.c.bf16 %v642, %v639
        %v724 = vpack.c.bf16 %v650, %v647
        %v725 = vpack.c.bf16 %v658, %v655
        %v726 = vpack.c.bf16 %v666, %v663
        %v727 = vpack.c.bf16 %v674, %v671
        %v728 = vpack.c.bf16 %v682, %v679
        %v729 = vpack.c.bf16 %v690, %v687
        %v730 = vpack.c.bf16 %v698, %v695
        %v731 = vpack.c.bf16 %v706, %v703
        %v732 = vpack.c.bf16 %v714, %v711
        %v734 = vpack.i.b16 %v422, %v422
        %v736 = vlaneseq
        %v737 = vshrl.u32 %v736, 7
        %v738 = vsub.s32 0, %v737
        %v739 = vrot.slane %v734, %v738
        %v740 = vadd.bf16 %v717, %v739
        %v741 = vadd.bf16 %v718, %v739
        %v742 = vadd.bf16 %v719, %v739
        %v743 = vadd.bf16 %v720, %v739
        %v744 = vadd.bf16 %v721, %v739
        %v745 = vadd.bf16 %v722, %v739
        %v746 = vadd.bf16 %v723, %v739
        %v747 = vadd.bf16 %v724, %v739
        %v748 = vadd.bf16 %v725, %v739
        %v749 = vadd.bf16 %v726, %v739
        %v750 = vadd.bf16 %v727, %v739
        %v751 = vadd.bf16 %v728, %v739
        %v752 = vadd.bf16 %v729, %v739
        %v753 = vadd.bf16 %v730, %v739
        %v754 = vadd.bf16 %v731, %v739
        %v755 = vadd.bf16 %v732, %v739
        %v756 = vmax.bf16 %v740, 0
        %v757 = vmax.bf16 %v741, 0
        %v758 = vmax.bf16 %v742, 0
        %v759 = vmax.bf16 %v743, 0
        %v760 = vmax.bf16 %v744, 0
        %v761 = vmax.bf16 %v745, 0
        %v762 = vmax.bf16 %v746, 0
        %v763 = vmax.bf16 %v747, 0
        %v764 = vmax.bf16 %v748, 0
        %v765 = vmax.bf16 %v749, 0
        %v766 = vmax.bf16 %v750, 0
        %v767 = vmax.bf16 %v751, 0
        %v768 = vmax.bf16 %v752, 0
        %v769 = vmax.bf16 %v753, 0
        %v770 = vmax.bf16 %v754, 0
        %v771 = vmax.bf16 %v755, 0
        %v772 = vld [vmem:[%s3] sm:$0xf]
        %v773 = vld [vmem:[%s3 + $0x4] sm:$0xf]
        %v774 = vld [vmem:[%s3 + $0x8] sm:$0xf]
        %v775 = vld [vmem:[%s3 + $0xc] sm:$0xf]
        %v776 = vld [vmem:[%s3 + $0x10] sm:$0xf]
        %v777 = vld [vmem:[%s3 + $0x14] sm:$0xf]
        %v778 = vld [vmem:[%s3 + $0x18] sm:$0xf]
        %v779 = vld [vmem:[%s3 + $0x1c] sm:$0xf]
        %v780 = vld [vmem:[%s3 + $0x20] sm:$0xf]
        %v781 = vld [vmem:[%s3 + $0x24] sm:$0xf]
        %v782 = vld [vmem:[%s3 + $0x28] sm:$0xf]
        %v783 = vld [vmem:[%s3 + $0x2c] sm:$0xf]
        %v784 = vld [vmem:[%s3 + $0x30] sm:$0xf]
        %v785 = vld [vmem:[%s3 + $0x34] sm:$0xf]
        %v786 = vld [vmem:[%s3 + $0x38] sm:$0xf]
        %v787 = vld [vmem:[%s3 + $0x3c] sm:$0xf]
        %v788 = vld [vmem:[%s4] sm:$0x1]
        %v805 = vunpack.c.l.b16 %v772
        %v806 = vunpack.c.l.b16 %v773
        %v807 = vunpack.c.l.b16 %v774
        %v808 = vunpack.c.l.b16 %v775
        %v809 = vunpack.c.l.b16 %v776
        %v810 = vunpack.c.l.b16 %v777
        %v811 = vunpack.c.l.b16 %v778
        %v812 = vunpack.c.l.b16 %v779
        %v813 = vunpack.c.l.b16 %v780
        %v814 = vunpack.c.l.b16 %v781
        %v815 = vunpack.c.l.b16 %v782
        %v816 = vunpack.c.l.b16 %v783
        %v817 = vunpack.c.l.b16 %v784
        %v818 = vunpack.c.l.b16 %v785
        %v819 = vunpack.c.l.b16 %v786
        %v820 = vunpack.c.l.b16 %v787
        %v821 = vpack.c.b16 %v806, %v805
        %v822 = vpack.c.b16 %v808, %v807
        %v823 = vpack.c.b16 %v810, %v809
        %v824 = vpack.c.b16 %v812, %v811
        %v825 = vpack.c.b16 %v814, %v813
        %v826 = vpack.c.b16 %v816, %v815
        %v827 = vpack.c.b16 %v818, %v817
        %v828 = vpack.c.b16 %v820, %v819
        %837 = vmatprep.subr.bf16.mxu0 0
        %838 = vmatpush1.bf16.msra.mxu0 %v821
        %839 = vmatprep.subr.bf16.mxu0 0
        %840 = vmatpush1.bf16.msra.mxu0 %v822
        %841 = vmatprep.subr.bf16.mxu0 0
        %842 = vmatpush1.bf16.msra.mxu0 %v823
        %843 = vmatprep.subr.bf16.mxu0 0
        %844 = vmatpush1.bf16.msra.mxu0 %v824
        %845 = vmatprep.subr.bf16.mxu0 0
        %846 = vmatpush1.bf16.msra.mxu0 %v825
        %847 = vmatprep.subr.bf16.mxu0 0
        %848 = vmatpush1.bf16.msra.mxu0 %v826
        %849 = vmatprep.subr.bf16.mxu0 0
        %850 = vmatpush1.bf16.msra.mxu0 %v827
        %851 = vmatprep.subr.bf16.mxu0 0
        %852 = vmatpush1.bf16.msra.mxu0 %v828
        %853 = vmatprep.subr.bf16.mxu0 0
        %854 = vmatpush1.bf16.msra.mxu0 0
        %855 = vmatprep.subr.bf16.mxu0 0
        %856 = vmatpush1.bf16.msra.mxu0 0
        %857 = vmatprep.subr.bf16.mxu0 0
        %858 = vmatpush1.bf16.msra.mxu0 0
        %859 = vmatprep.subr.bf16.mxu0 0
        %860 = vmatpush1.bf16.msra.mxu0 0
        %861 = vmatprep.subr.bf16.mxu0 0
        %862 = vmatpush1.bf16.msra.mxu0 0
        %863 = vmatprep.subr.bf16.mxu0 0
        %864 = vmatpush1.bf16.msra.mxu0 0
        %865 = vmatprep.subr.bf16.mxu0 0
        %866 = vmatpush1.bf16.msra.mxu0 0
        %867 = vmatprep.subr.bf16.mxu0 0
        %868 = vmatpush1.bf16.msra.mxu0 0
        %869 = vmatprep.mubr.bf16.mxu0 0
        %870 = vmatmul.mubr.bf16.gmra.mrb[0].mxu0 %v756
        %v871 = vpop.f32.mrb[0].mxu0
        %v872 = vadd.f32 0.0, %v871
        %v873 = vpop.f32.mrb[0].mxu0
        %v874 = vpop.f32.mrb[0].mxu0
        %v875 = vadd.f32 0.0, %v874
        %v876 = vpop.f32.mrb[0].mxu0
        %877 = vmatprep.mubr.bf16.mxu0 0
        %878 = vmatmul.mubr.bf16.gmra.mrb[0].mxu0 %v757
        %v879 = vpop.f32.mrb[0].mxu0
        %v880 = vadd.f32 0.0, %v879
        %v881 = vpop.f32.mrb[0].mxu0
        %v882 = vpop.f32.mrb[0].mxu0
        %v883 = vadd.f32 0.0, %v882
        %v884 = vpop.f32.mrb[0].mxu0
        %885 = vmatprep.mubr.bf16.mxu0 0
        %886 = vmatmul.mubr.bf16.gmra.mrb[0].mxu0 %v758
        %v887 = vpop.f32.mrb[0].mxu0
        %v888 = vadd.f32 0.0, %v887
        %v889 = vpop.f32.mrb[0].mxu0
        %v890 = vpop.f32.mrb[0].mxu0
        %v891 = vadd.f32 0.0, %v890
        %v892 = vpop.f32.mrb[0].mxu0
        %893 = vmatprep.mubr.bf16.mxu0 0
        %894 = vmatmul.mubr.bf16.gmra.mrb[0].mxu0 %v759
        %v895 = vpop.f32.mrb[0].mxu0
        %v896 = vadd.f32 0.0, %v895
        %v897 = vpop.f32.mrb[0].mxu0
        %v898 = vpop.f32.mrb[0].mxu0
        %v899 = vadd.f32 0.0, %v898
        %v900 = vpop.f32.mrb[0].mxu0
        %901 = vmatprep.mubr.bf16.mxu0 0
        %902 = vmatmul.mubr.bf16.gmra.mrb[0].mxu0 %v760
        %v903 = vpop.f32.mrb[0].mxu0
        %v904 = vadd.f32 0.0, %v903
        %v905 = vpop.f32.mrb[0].mxu0
        %v906 = vpop.f32.mrb[0].mxu0
        %v907 = vadd.f32 0.0, %v906
        %v908 = vpop.f32.mrb[0].mxu0
        %909 = vmatprep.mubr.bf16.mxu0 0
        %910 = vmatmul.mubr.bf16.gmra.mrb[0].mxu0 %v761
        %v911 = vpop.f32.mrb[0].mxu0
        %v912 = vadd.f32 0.0, %v911
        %v913 = vpop.f32.mrb[0].mxu0
        %v914 = vpop.f32.mrb[0].mxu0
        %v915 = vadd.f32 0.0, %v914
        %v916 = vpop.f32.mrb[0].mxu0
        %917 = vmatprep.mubr.bf16.mxu0 0
        %918 = vmatmul.mubr.bf16.gmra.mrb[0].mxu0 %v762
        %v919 = vpop.f32.mrb[0].mxu0
        %v920 = vadd.f32 0.0, %v919
        %v921 = vpop.f32.mrb[0].mxu0
        %v922 = vpop.f32.mrb[0].mxu0
        %v923 = vadd.f32 0.0, %v922
        %v924 = vpop.f32.mrb[0].mxu0
        %925 = vmatprep.mubr.bf16.mxu0 0
        %926 = vmatmul.mubr.bf16.gmra.mrb[0].mxu0 %v763
        %v927 = vpop.f32.mrb[0].mxu0
        %v928 = vadd.f32 0.0, %v927
        %v929 = vpop.f32.mrb[0].mxu0
        %v930 = vpop.f32.mrb[0].mxu0
        %v931 = vadd.f32 0.0, %v930
        %v932 = vpop.f32.mrb[0].mxu0
        %933 = vmatprep.mubr.bf16.mxu0 0
        %934 = vmatmul.mubr.bf16.gmra.mrb[0].mxu0 %v764
        %v935 = vpop.f32.mrb[0].mxu0
        %v936 = vadd.f32 0.0, %v935
        %v937 = vpop.f32.mrb[0].mxu0
        %v938 = vpop.f32.mrb[0].mxu0
        %v939 = vadd.f32 0.0, %v938
        %v940 = vpop.f32.mrb[0].mxu0
        %941 = vmatprep.mubr.bf16.mxu0 0
        %942 = vmatmul.mubr.bf16.gmra.mrb[0].mxu0 %v765
        %v943 = vpop.f32.mrb[0].mxu0
        %v944 = vadd.f32 0.0, %v943
        %v945 = vpop.f32.mrb[0].mxu0
        %v946 = vpop.f32.mrb[0].mxu0
        %v947 = vadd.f32 0.0, %v946
        %v948 = vpop.f32.mrb[0].mxu0
        %949 = vmatprep.mubr.bf16.mxu0 0
        %950 = vmatmul.mubr.bf16.gmra.mrb[0].mxu0 %v766
        %v951 = vpop.f32.mrb[0].mxu0
        %v952 = vadd.f32 0.0, %v951
        %v953 = vpop.f32.mrb[0].mxu0
        %v954 = vpop.f32.mrb[0].mxu0
        %v955 = vadd.f32 0.0, %v954
        %v956 = vpop.f32.mrb[0].mxu0
        %957 = vmatprep.mubr.bf16.mxu0 0
        %958 = vmatmul.mubr.bf16.gmra.mrb[0].mxu0 %v767
        %v959 = vpop.f32.mrb[0].mxu0
        %v960 = vadd.f32 0.0, %v959
        %v961 = vpop.f32.mrb[0].mxu0
        %v962 = vpop.f32.mrb[0].mxu0
        %v963 = vadd.f32 0.0, %v962
        %v964 = vpop.f32.mrb[0].mxu0
        %965 = vmatprep.mubr.bf16.mxu0 0
        %966 = vmatmul.mubr.bf16.gmra.mrb[0].mxu0 %v768
        %v967 = vpop.f32.mrb[0].mxu0
        %v968 = vadd.f32 0.0, %v967
        %v969 = vpop.f32.mrb[0].mxu0
        %v970 = vpop.f32.mrb[0].mxu0
        %v971 = vadd.f32 0.0, %v970
        %v972 = vpop.f32.mrb[0].mxu0
        %973 = vmatprep.mubr.bf16.mxu0 0
        %974 = vmatmul.mubr.bf16.gmra.mrb[0].mxu0 %v769
        %v975 = vpop.f32.mrb[0].mxu0
        %v976 = vadd.f32 0.0, %v975
        %v977 = vpop.f32.mrb[0].mxu0
        %v978 = vpop.f32.mrb[0].mxu0
        %v979 = vadd.f32 0.0, %v978
        %v980 = vpop.f32.mrb[0].mxu0
        %981 = vmatprep.mubr.bf16.mxu0 0
        %982 = vmatmul.mubr.bf16.gmra.mrb[0].mxu0 %v770
        %v983 = vpop.f32.mrb[0].mxu0
        %v984 = vadd.f32 0.0, %v983
        %v985 = vpop.f32.mrb[0].mxu0
        %v986 = vpop.f32.mrb[0].mxu0
        %v987 = vadd.f32 0.0, %v986
        %v988 = vpop.f32.mrb[0].mxu0
        %989 = vmatprep.mubr.bf16.mxu0 0
        %990 = vmatmul.mubr.bf16.gmra.mrb[0].mxu0 %v771
        %v991 = vpop.f32.mrb[0].mxu0
        %v992 = vadd.f32 0.0, %v991
        %v993 = vpop.f32.mrb[0].mxu0
        %v994 = vpop.f32.mrb[0].mxu0
        %v995 = vadd.f32 0.0, %v994
        %v996 = vpop.f32.mrb[0].mxu0
        %997 = vdwg.mxu0
        %v998 = vpack.c.bf16 %v875, %v872
        %v999 = vpack.c.bf16 %v883, %v880
        %v1000 = vpack.c.bf16 %v891, %v888
        %v1001 = vpack.c.bf16 %v899, %v896
        %v1002 = vpack.c.bf16 %v907, %v904
        %v1003 = vpack.c.bf16 %v915, %v912
        %v1004 = vpack.c.bf16 %v923, %v920
        %v1005 = vpack.c.bf16 %v931, %v928
        %v1006 = vpack.c.bf16 %v939, %v936
        %v1007 = vpack.c.bf16 %v947, %v944
        %v1008 = vpack.c.bf16 %v955, %v952
        %v1009 = vpack.c.bf16 %v963, %v960
        %v1010 = vpack.c.bf16 %v971, %v968
        %v1011 = vpack.c.bf16 %v979, %v976
        %v1012 = vpack.c.bf16 %v987, %v984
        %v1013 = vpack.c.bf16 %v995, %v992
        %v1015 = vpack.i.b16 %v788, %v788
        %v1017 = vlaneseq
        %v1018 = vshrl.u32 %v1017, 7
        %v1019 = vsub.s32 0, %v1018
        %v1020 = vrot.slane %v1015, %v1019
        %v1021 = vadd.bf16 %v998, %v1020
        %v1022 = vadd.bf16 %v999, %v1020
        %v1023 = vadd.bf16 %v1000, %v1020
        %v1024 = vadd.bf16 %v1001, %v1020
        %v1025 = vadd.bf16 %v1002, %v1020
        %v1026 = vadd.bf16 %v1003, %v1020
        %v1027 = vadd.bf16 %v1004, %v1020
        %v1028 = vadd.bf16 %v1005, %v1020
        %v1029 = vadd.bf16 %v1006, %v1020
        %v1030 = vadd.bf16 %v1007, %v1020
        %v1031 = vadd.bf16 %v1008, %v1020
        %v1032 = vadd.bf16 %v1009, %v1020
        %v1033 = vadd.bf16 %v1010, %v1020
        %v1034 = vadd.bf16 %v1011, %v1020
        %v1035 = vadd.bf16 %v1012, %v1020
        %v1036 = vadd.bf16 %v1013, %v1020
        %v1037 = vmax.bf16 %v1021, 0
        %v1038 = vmax.bf16 %v1022, 0
        %v1039 = vmax.bf16 %v1023, 0
        %v1040 = vmax.bf16 %v1024, 0
        %v1041 = vmax.bf16 %v1025, 0
        %v1042 = vmax.bf16 %v1026, 0
        %v1043 = vmax.bf16 %v1027, 0
        %v1044 = vmax.bf16 %v1028, 0
        %v1045 = vmax.bf16 %v1029, 0
        %v1046 = vmax.bf16 %v1030, 0
        %v1047 = vmax.bf16 %v1031, 0
        %v1048 = vmax.bf16 %v1032, 0
        %v1049 = vmax.bf16 %v1033, 0
        %v1050 = vmax.bf16 %v1034, 0
        %v1051 = vmax.bf16 %v1035, 0
        %v1052 = vmax.bf16 %v1036, 0
        %v1053 = vld [vmem:[%s5] sm:$0xf]
        %v1054 = vld [vmem:[%s5 + $0x4] sm:$0xf]
        %v1055 = vld [vmem:[%s5 + $0x8] sm:$0xf]
        %v1056 = vld [vmem:[%s5 + $0xc] sm:$0xf]
        %v1057 = vld [vmem:[%s5 + $0x10] sm:$0xf]
        %v1058 = vld [vmem:[%s5 + $0x14] sm:$0xf]
        %v1059 = vld [vmem:[%s5 + $0x18] sm:$0xf]
        %v1060 = vld [vmem:[%s5 + $0x1c] sm:$0xf]
        %v1061 = vld [vmem:[%s5 + $0x20] sm:$0xf]
        %v1062 = vld [vmem:[%s5 + $0x24] sm:$0xf]
        %v1063 = vld [vmem:[%s5 + $0x28] sm:$0xf]
        %v1064 = vld [vmem:[%s5 + $0x2c] sm:$0xf]
        %v1065 = vld [vmem:[%s5 + $0x30] sm:$0xf]
        %v1066 = vld [vmem:[%s5 + $0x34] sm:$0xf]
        %v1067 = vld [vmem:[%s5 + $0x38] sm:$0xf]
        %v1068 = vld [vmem:[%s5 + $0x3c] sm:$0xf]
        %v1069 = vld [vmem:[%s6] sm:$0x1]
        %v1086 = vunpack.c.l.b16 %v1053
        %v1087 = vunpack.c.l.b16 %v1054
        %v1088 = vunpack.c.l.b16 %v1055
        %v1089 = vunpack.c.l.b16 %v1056
        %v1090 = vunpack.c.l.b16 %v1057
        %v1091 = vunpack.c.l.b16 %v1058
        %v1092 = vunpack.c.l.b16 %v1059
        %v1093 = vunpack.c.l.b16 %v1060
        %v1094 = vunpack.c.l.b16 %v1061
        %v1095 = vunpack.c.l.b16 %v1062
        %v1096 = vunpack.c.l.b16 %v1063
        %v1097 = vunpack.c.l.b16 %v1064
        %v1098 = vunpack.c.l.b16 %v1065
        %v1099 = vunpack.c.l.b16 %v1066
        %v1100 = vunpack.c.l.b16 %v1067
        %v1101 = vunpack.c.l.b16 %v1068
        %v1102 = vpack.c.b16 %v1087, %v1086
        %v1103 = vpack.c.b16 %v1089, %v1088
        %v1104 = vpack.c.b16 %v1091, %v1090
        %v1105 = vpack.c.b16 %v1093, %v1092
        %v1106 = vpack.c.b16 %v1095, %v1094
        %v1107 = vpack.c.b16 %v1097, %v1096
        %v1108 = vpack.c.b16 %v1099, %v1098
        %v1109 = vpack.c.b16 %v1101, %v1100
        %1118 = vmatprep.subr.bf16.mxu0 0
        %1119 = vmatpush1.bf16.msra.mxu0 %v1102
        %1120 = vmatprep.subr.bf16.mxu0 0
        %1121 = vmatpush1.bf16.msra.mxu0 %v1103
        %1122 = vmatprep.subr.bf16.mxu0 0
        %1123 = vmatpush1.bf16.msra.mxu0 %v1104
        %1124 = vmatprep.subr.bf16.mxu0 0
        %1125 = vmatpush1.bf16.msra.mxu0 %v1105
        %1126 = vmatprep.subr.bf16.mxu0 0
        %1127 = vmatpush1.bf16.msra.mxu0 %v1106
        %1128 = vmatprep.subr.bf16.mxu0 0
        %1129 = vmatpush1.bf16.msra.mxu0 %v1107
        %1130 = vmatprep.subr.bf16.mxu0 0
        %1131 = vmatpush1.bf16.msra.mxu0 %v1108
        %1132 = vmatprep.subr.bf16.mxu0 0
        %1133 = vmatpush1.bf16.msra.mxu0 %v1109
        %1134 = vmatprep.subr.bf16.mxu0 0
        %1135 = vmatpush1.bf16.msra.mxu0 0
        %1136 = vmatprep.subr.bf16.mxu0 0
        %1137 = vmatpush1.bf16.msra.mxu0 0
        %1138 = vmatprep.subr.bf16.mxu0 0
        %1139 = vmatpush1.bf16.msra.mxu0 0
        %1140 = vmatprep.subr.bf16.mxu0 0
        %1141 = vmatpush1.bf16.msra.mxu0 0
        %1142 = vmatprep.subr.bf16.mxu0 0
        %1143 = vmatpush1.bf16.msra.mxu0 0
        %1144 = vmatprep.subr.bf16.mxu0 0
        %1145 = vmatpush1.bf16.msra.mxu0 0
        %1146 = vmatprep.subr.bf16.mxu0 0
        %1147 = vmatpush1.bf16.msra.mxu0 0
        %1148 = vmatprep.subr.bf16.mxu0 0
        %1149 = vmatpush1.bf16.msra.mxu0 0
        %1150 = vmatprep.mubr.bf16.mxu0 0
        %1151 = vmatmul.mubr.bf16.gmra.mrb[0].mxu0 %v1037
        %v1152 = vpop.f32.mrb[0].mxu0
        %v1153 = vadd.f32 0.0, %v1152
        %v1154 = vpop.f32.mrb[0].mxu0
        %v1155 = vpop.f32.mrb[0].mxu0
        %v1156 = vadd.f32 0.0, %v1155
        %v1157 = vpop.f32.mrb[0].mxu0
        %1158 = vmatprep.mubr.bf16.mxu0 0
        %1159 = vmatmul.mubr.bf16.gmra.mrb[0].mxu0 %v1038
        %v1160 = vpop.f32.mrb[0].mxu0
        %v1161 = vadd.f32 0.0, %v1160
        %v1162 = vpop.f32.mrb[0].mxu0
        %v1163 = vpop.f32.mrb[0].mxu0
        %v1164 = vadd.f32 0.0, %v1163
        %v1165 = vpop.f32.mrb[0].mxu0
        %1166 = vmatprep.mubr.bf16.mxu0 0
        %1167 = vmatmul.mubr.bf16.gmra.mrb[0].mxu0 %v1039
        %v1168 = vpop.f32.mrb[0].mxu0
        %v1169 = vadd.f32 0.0, %v1168
        %v1170 = vpop.f32.mrb[0].mxu0
        %v1171 = vpop.f32.mrb[0].mxu0
        %v1172 = vadd.f32 0.0, %v1171
        %v1173 = vpop.f32.mrb[0].mxu0
        %1174 = vmatprep.mubr.bf16.mxu0 0
        %1175 = vmatmul.mubr.bf16.gmra.mrb[0].mxu0 %v1040
        %v1176 = vpop.f32.mrb[0].mxu0
        %v1177 = vadd.f32 0.0, %v1176
        %v1178 = vpop.f32.mrb[0].mxu0
        %v1179 = vpop.f32.mrb[0].mxu0
        %v1180 = vadd.f32 0.0, %v1179
        %v1181 = vpop.f32.mrb[0].mxu0
        %1182 = vmatprep.mubr.bf16.mxu0 0
        %1183 = vmatmul.mubr.bf16.gmra.mrb[0].mxu0 %v1041
        %v1184 = vpop.f32.mrb[0].mxu0
        %v1185 = vadd.f32 0.0, %v1184
        %v1186 = vpop.f32.mrb[0].mxu0
        %v1187 = vpop.f32.mrb[0].mxu0
        %v1188 = vadd.f32 0.0, %v1187
        %v1189 = vpop.f32.mrb[0].mxu0
        %1190 = vmatprep.mubr.bf16.mxu0 0
        %1191 = vmatmul.mubr.bf16.gmra.mrb[0].mxu0 %v1042
        %v1192 = vpop.f32.mrb[0].mxu0
        %v1193 = vadd.f32 0.0, %v1192
        %v1194 = vpop.f32.mrb[0].mxu0
        %v1195 = vpop.f32.mrb[0].mxu0
        %v1196 = vadd.f32 0.0, %v1195
        %v1197 = vpop.f32.mrb[0].mxu0
        %1198 = vmatprep.mubr.bf16.mxu0 0
        %1199 = vmatmul.mubr.bf16.gmra.mrb[0].mxu0 %v1043
        %v1200 = vpop.f32.mrb[0].mxu0
        %v1201 = vadd.f32 0.0, %v1200
        %v1202 = vpop.f32.mrb[0].mxu0
        %v1203 = vpop.f32.mrb[0].mxu0
        %v1204 = vadd.f32 0.0, %v1203
        %v1205 = vpop.f32.mrb[0].mxu0
        %1206 = vmatprep.mubr.bf16.mxu0 0
        %1207 = vmatmul.mubr.bf16.gmra.mrb[0].mxu0 %v1044
        %v1208 = vpop.f32.mrb[0].mxu0
        %v1209 = vadd.f32 0.0, %v1208
        %v1210 = vpop.f32.mrb[0].mxu0
        %v1211 = vpop.f32.mrb[0].mxu0
        %v1212 = vadd.f32 0.0, %v1211
        %v1213 = vpop.f32.mrb[0].mxu0
        %1214 = vmatprep.mubr.bf16.mxu0 0
        %1215 = vmatmul.mubr.bf16.gmra.mrb[0].mxu0 %v1045
        %v1216 = vpop.f32.mrb[0].mxu0
        %v1217 = vadd.f32 0.0, %v1216
        %v1218 = vpop.f32.mrb[0].mxu0
        %v1219 = vpop.f32.mrb[0].mxu0
        %v1220 = vadd.f32 0.0, %v1219
        %v1221 = vpop.f32.mrb[0].mxu0
        %1222 = vmatprep.mubr.bf16.mxu0 0
        %1223 = vmatmul.mubr.bf16.gmra.mrb[0].mxu0 %v1046
        %v1224 = vpop.f32.mrb[0].mxu0
        %v1225 = vadd.f32 0.0, %v1224
        %v1226 = vpop.f32.mrb[0].mxu0
        %v1227 = vpop.f32.mrb[0].mxu0
        %v1228 = vadd.f32 0.0, %v1227
        %v1229 = vpop.f32.mrb[0].mxu0
        %1230 = vmatprep.mubr.bf16.mxu0 0
        %1231 = vmatmul.mubr.bf16.gmra.mrb[0].mxu0 %v1047
        %v1232 = vpop.f32.mrb[0].mxu0
        %v1233 = vadd.f32 0.0, %v1232
        %v1234 = vpop.f32.mrb[0].mxu0
        %v1235 = vpop.f32.mrb[0].mxu0
        %v1236 = vadd.f32 0.0, %v1235
        %v1237 = vpop.f32.mrb[0].mxu0
        %1238 = vmatprep.mubr.bf16.mxu0 0
        %1239 = vmatmul.mubr.bf16.gmra.mrb[0].mxu0 %v1048
        %v1240 = vpop.f32.mrb[0].mxu0
        %v1241 = vadd.f32 0.0, %v1240
        %v1242 = vpop.f32.mrb[0].mxu0
        %v1243 = vpop.f32.mrb[0].mxu0
        %v1244 = vadd.f32 0.0, %v1243
        %v1245 = vpop.f32.mrb[0].mxu0
        %1246 = vmatprep.mubr.bf16.mxu0 0
        %1247 = vmatmul.mubr.bf16.gmra.mrb[0].mxu0 %v1049
        %v1248 = vpop.f32.mrb[0].mxu0
        %v1249 = vadd.f32 0.0, %v1248
        %v1250 = vpop.f32.mrb[0].mxu0
        %v1251 = vpop.f32.mrb[0].mxu0
        %v1252 = vadd.f32 0.0, %v1251
        %v1253 = vpop.f32.mrb[0].mxu0
        %1254 = vmatprep.mubr.bf16.mxu0 0
        %1255 = vmatmul.mubr.bf16.gmra.mrb[0].mxu0 %v1050
        %v1256 = vpop.f32.mrb[0].mxu0
        %v1257 = vadd.f32 0.0, %v1256
        %v1258 = vpop.f32.mrb[0].mxu0
        %v1259 = vpop.f32.mrb[0].mxu0
        %v1260 = vadd.f32 0.0, %v1259
        %v1261 = vpop.f32.mrb[0].mxu0
        %1262 = vmatprep.mubr.bf16.mxu0 0
        %1263 = vmatmul.mubr.bf16.gmra.mrb[0].mxu0 %v1051
        %v1264 = vpop.f32.mrb[0].mxu0
        %v1265 = vadd.f32 0.0, %v1264
        %v1266 = vpop.f32.mrb[0].mxu0
        %v1267 = vpop.f32.mrb[0].mxu0
        %v1268 = vadd.f32 0.0, %v1267
        %v1269 = vpop.f32.mrb[0].mxu0
        %1270 = vmatprep.mubr.bf16.mxu0 0
        %1271 = vmatmul.mubr.bf16.gmra.mrb[0].mxu0 %v1052
        %v1272 = vpop.f32.mrb[0].mxu0
        %v1273 = vadd.f32 0.0, %v1272
        %v1274 = vpop.f32.mrb[0].mxu0
        %v1275 = vpop.f32.mrb[0].mxu0
        %v1276 = vadd.f32 0.0, %v1275
        %v1277 = vpop.f32.mrb[0].mxu0
        %1278 = vdwg.mxu0
        %v1279 = vpack.c.bf16 %v1156, %v1153
        %v1280 = vpack.c.bf16 %v1164, %v1161
        %v1281 = vpack.c.bf16 %v1172, %v1169
        %v1282 = vpack.c.bf16 %v1180, %v1177
        %v1283 = vpack.c.bf16 %v1188, %v1185
        %v1284 = vpack.c.bf16 %v1196, %v1193
        %v1285 = vpack.c.bf16 %v1204, %v1201
        %v1286 = vpack.c.bf16 %v1212, %v1209
        %v1287 = vpack.c.bf16 %v1220, %v1217
        %v1288 = vpack.c.bf16 %v1228, %v1225
        %v1289 = vpack.c.bf16 %v1236, %v1233
        %v1290 = vpack.c.bf16 %v1244, %v1241
        %v1291 = vpack.c.bf16 %v1252, %v1249
        %v1292 = vpack.c.bf16 %v1260, %v1257
        %v1293 = vpack.c.bf16 %v1268, %v1265
        %v1294 = vpack.c.bf16 %v1276, %v1273
        %v1296 = vpack.i.b16 %v1069, %v1069
        %v1298 = vlaneseq
        %v1299 = vshrl.u32 %v1298, 7
        %v1300 = vsub.s32 0, %v1299
        %v1301 = vrot.slane %v1296, %v1300
        %v1302 = vadd.bf16 %v1279, %v1301
        %v1303 = vadd.bf16 %v1280, %v1301
        %v1304 = vadd.bf16 %v1281, %v1301
        %v1305 = vadd.bf16 %v1282, %v1301
        %v1306 = vadd.bf16 %v1283, %v1301
        %v1307 = vadd.bf16 %v1284, %v1301
        %v1308 = vadd.bf16 %v1285, %v1301
        %v1309 = vadd.bf16 %v1286, %v1301
        %v1310 = vadd.bf16 %v1287, %v1301
        %v1311 = vadd.bf16 %v1288, %v1301
        %v1312 = vadd.bf16 %v1289, %v1301
        %v1313 = vadd.bf16 %v1290, %v1301
        %v1314 = vadd.bf16 %v1291, %v1301
        %v1315 = vadd.bf16 %v1292, %v1301
        %v1316 = vadd.bf16 %v1293, %v1301
        %v1317 = vadd.bf16 %v1294, %v1301
        %v1318 = vmax.bf16 %v1302, 0
        %v1319 = vmax.bf16 %v1303, 0
        %v1320 = vmax.bf16 %v1304, 0
        %v1321 = vmax.bf16 %v1305, 0
        %v1322 = vmax.bf16 %v1306, 0
        %v1323 = vmax.bf16 %v1307, 0
        %v1324 = vmax.bf16 %v1308, 0
        %v1325 = vmax.bf16 %v1309, 0
        %v1326 = vmax.bf16 %v1310, 0
        %v1327 = vmax.bf16 %v1311, 0
        %v1328 = vmax.bf16 %v1312, 0
        %v1329 = vmax.bf16 %v1313, 0
        %v1330 = vmax.bf16 %v1314, 0
        %v1331 = vmax.bf16 %v1315, 0
        %v1332 = vmax.bf16 %v1316, 0
        %v1333 = vmax.bf16 %v1317, 0
        %v1334 = vld [vmem:[%s7] sm:$0xf]
        %v1335 = vld [vmem:[%s7 + $0x4] sm:$0xf]
        %v1336 = vld [vmem:[%s7 + $0x8] sm:$0xf]
        %v1337 = vld [vmem:[%s7 + $0xc] sm:$0xf]
        %v1338 = vld [vmem:[%s7 + $0x10] sm:$0xf]
        %v1339 = vld [vmem:[%s7 + $0x14] sm:$0xf]
        %v1340 = vld [vmem:[%s7 + $0x18] sm:$0xf]
        %v1341 = vld [vmem:[%s7 + $0x1c] sm:$0xf]
        %v1342 = vld [vmem:[%s7 + $0x20] sm:$0xf]
        %v1343 = vld [vmem:[%s7 + $0x24] sm:$0xf]
        %v1344 = vld [vmem:[%s7 + $0x28] sm:$0xf]
        %v1345 = vld [vmem:[%s7 + $0x2c] sm:$0xf]
        %v1346 = vld [vmem:[%s7 + $0x30] sm:$0xf]
        %v1347 = vld [vmem:[%s7 + $0x34] sm:$0xf]
        %v1348 = vld [vmem:[%s7 + $0x38] sm:$0xf]
        %v1349 = vld [vmem:[%s7 + $0x3c] sm:$0xf]
        %v1350 = vld [vmem:[%s8] sm:$0x1]
        %v1367 = vunpack.c.l.b16 %v1334
        %v1368 = vunpack.c.l.b16 %v1335
        %v1369 = vunpack.c.l.b16 %v1336
        %v1370 = vunpack.c.l.b16 %v1337
        %v1371 = vunpack.c.l.b16 %v1338
        %v1372 = vunpack.c.l.b16 %v1339
        %v1373 = vunpack.c.l.b16 %v1340
        %v1374 = vunpack.c.l.b16 %v1341
        %v1375 = vunpack.c.l.b16 %v1342
        %v1376 = vunpack.c.l.b16 %v1343
        %v1377 = vunpack.c.l.b16 %v1344
        %v1378 = vunpack.c.l.b16 %v1345
        %v1379 = vunpack.c.l.b16 %v1346
        %v1380 = vunpack.c.l.b16 %v1347
        %v1381 = vunpack.c.l.b16 %v1348
        %v1382 = vunpack.c.l.b16 %v1349
        %v1383 = vpack.c.b16 %v1368, %v1367
        %v1384 = vpack.c.b16 %v1370, %v1369
        %v1385 = vpack.c.b16 %v1372, %v1371
        %v1386 = vpack.c.b16 %v1374, %v1373
        %v1387 = vpack.c.b16 %v1376, %v1375
        %v1388 = vpack.c.b16 %v1378, %v1377
        %v1389 = vpack.c.b16 %v1380, %v1379
        %v1390 = vpack.c.b16 %v1382, %v1381
        %1399 = vmatprep.subr.bf16.mxu0 0
        %1400 = vmatpush1.bf16.msra.mxu0 %v1383
        %1401 = vmatprep.subr.bf16.mxu0 0
        %1402 = vmatpush1.bf16.msra.mxu0 %v1384
        %1403 = vmatprep.subr.bf16.mxu0 0
        %1404 = vmatpush1.bf16.msra.mxu0 %v1385
        %1405 = vmatprep.subr.bf16.mxu0 0
        %1406 = vmatpush1.bf16.msra.mxu0 %v1386
        %1407 = vmatprep.subr.bf16.mxu0 0
        %1408 = vmatpush1.bf16.msra.mxu0 %v1387
        %1409 = vmatprep.subr.bf16.mxu0 0
        %1410 = vmatpush1.bf16.msra.mxu0 %v1388
        %1411 = vmatprep.subr.bf16.mxu0 0
        %1412 = vmatpush1.bf16.msra.mxu0 %v1389
        %1413 = vmatprep.subr.bf16.mxu0 0
        %1414 = vmatpush1.bf16.msra.mxu0 %v1390
        %1415 = vmatprep.subr.bf16.mxu0 0
        %1416 = vmatpush1.bf16.msra.mxu0 0
        %1417 = vmatprep.subr.bf16.mxu0 0
        %1418 = vmatpush1.bf16.msra.mxu0 0
        %1419 = vmatprep.subr.bf16.mxu0 0
        %1420 = vmatpush1.bf16.msra.mxu0 0
        %1421 = vmatprep.subr.bf16.mxu0 0
        %1422 = vmatpush1.bf16.msra.mxu0 0
        %1423 = vmatprep.subr.bf16.mxu0 0
        %1424 = vmatpush1.bf16.msra.mxu0 0
        %1425 = vmatprep.subr.bf16.mxu0 0
        %1426 = vmatpush1.bf16.msra.mxu0 0
        %1427 = vmatprep.subr.bf16.mxu0 0
        %1428 = vmatpush1.bf16.msra.mxu0 0
        %1429 = vmatprep.subr.bf16.mxu0 0
        %1430 = vmatpush1.bf16.msra.mxu0 0
        %1431 = vmatprep.mubr.bf16.mxu0 0
        %1432 = vmatmul.mubr.bf16.gmra.mrb[0].mxu0 %v1318
        %v1433 = vpop.f32.mrb[0].mxu0
        %v1434 = vadd.f32 0.0, %v1433
        %v1435 = vpop.f32.mrb[0].mxu0
        %v1436 = vpop.f32.mrb[0].mxu0
        %v1437 = vadd.f32 0.0, %v1436
        %v1438 = vpop.f32.mrb[0].mxu0
        %1439 = vmatprep.mubr.bf16.mxu0 0
        %1440 = vmatmul.mubr.bf16.gmra.mrb[0].mxu0 %v1319
        %v1441 = vpop.f32.mrb[0].mxu0
        %v1442 = vadd.f32 0.0, %v1441
        %v1443 = vpop.f32.mrb[0].mxu0
        %v1444 = vpop.f32.mrb[0].mxu0
        %v1445 = vadd.f32 0.0, %v1444
        %v1446 = vpop.f32.mrb[0].mxu0
        %1447 = vmatprep.mubr.bf16.mxu0 0
        %1448 = vmatmul.mubr.bf16.gmra.mrb[0].mxu0 %v1320
        %v1449 = vpop.f32.mrb[0].mxu0
        %v1450 = vadd.f32 0.0, %v1449
        %v1451 = vpop.f32.mrb[0].mxu0
        %v1452 = vpop.f32.mrb[0].mxu0
        %v1453 = vadd.f32 0.0, %v1452
        %v1454 = vpop.f32.mrb[0].mxu0
        %1455 = vmatprep.mubr.bf16.mxu0 0
        %1456 = vmatmul.mubr.bf16.gmra.mrb[0].mxu0 %v1321
        %v1457 = vpop.f32.mrb[0].mxu0
        %v1458 = vadd.f32 0.0, %v1457
        %v1459 = vpop.f32.mrb[0].mxu0
        %v1460 = vpop.f32.mrb[0].mxu0
        %v1461 = vadd.f32 0.0, %v1460
        %v1462 = vpop.f32.mrb[0].mxu0
        %1463 = vmatprep.mubr.bf16.mxu0 0
        %1464 = vmatmul.mubr.bf16.gmra.mrb[0].mxu0 %v1322
        %v1465 = vpop.f32.mrb[0].mxu0
        %v1466 = vadd.f32 0.0, %v1465
        %v1467 = vpop.f32.mrb[0].mxu0
        %v1468 = vpop.f32.mrb[0].mxu0
        %v1469 = vadd.f32 0.0, %v1468
        %v1470 = vpop.f32.mrb[0].mxu0
        %1471 = vmatprep.mubr.bf16.mxu0 0
        %1472 = vmatmul.mubr.bf16.gmra.mrb[0].mxu0 %v1323
        %v1473 = vpop.f32.mrb[0].mxu0
        %v1474 = vadd.f32 0.0, %v1473
        %v1475 = vpop.f32.mrb[0].mxu0
        %v1476 = vpop.f32.mrb[0].mxu0
        %v1477 = vadd.f32 0.0, %v1476
        %v1478 = vpop.f32.mrb[0].mxu0
        %1479 = vmatprep.mubr.bf16.mxu0 0
        %1480 = vmatmul.mubr.bf16.gmra.mrb[0].mxu0 %v1324
        %v1481 = vpop.f32.mrb[0].mxu0
        %v1482 = vadd.f32 0.0, %v1481
        %v1483 = vpop.f32.mrb[0].mxu0
        %v1484 = vpop.f32.mrb[0].mxu0
        %v1485 = vadd.f32 0.0, %v1484
        %v1486 = vpop.f32.mrb[0].mxu0
        %1487 = vmatprep.mubr.bf16.mxu0 0
        %1488 = vmatmul.mubr.bf16.gmra.mrb[0].mxu0 %v1325
        %v1489 = vpop.f32.mrb[0].mxu0
        %v1490 = vadd.f32 0.0, %v1489
        %v1491 = vpop.f32.mrb[0].mxu0
        %v1492 = vpop.f32.mrb[0].mxu0
        %v1493 = vadd.f32 0.0, %v1492
        %v1494 = vpop.f32.mrb[0].mxu0
        %1495 = vmatprep.mubr.bf16.mxu0 0
        %1496 = vmatmul.mubr.bf16.gmra.mrb[0].mxu0 %v1326
        %v1497 = vpop.f32.mrb[0].mxu0
        %v1498 = vadd.f32 0.0, %v1497
        %v1499 = vpop.f32.mrb[0].mxu0
        %v1500 = vpop.f32.mrb[0].mxu0
        %v1501 = vadd.f32 0.0, %v1500
        %v1502 = vpop.f32.mrb[0].mxu0
        %1503 = vmatprep.mubr.bf16.mxu0 0
        %1504 = vmatmul.mubr.bf16.gmra.mrb[0].mxu0 %v1327
        %v1505 = vpop.f32.mrb[0].mxu0
        %v1506 = vadd.f32 0.0, %v1505
        %v1507 = vpop.f32.mrb[0].mxu0
        %v1508 = vpop.f32.mrb[0].mxu0
        %v1509 = vadd.f32 0.0, %v1508
        %v1510 = vpop.f32.mrb[0].mxu0
        %1511 = vmatprep.mubr.bf16.mxu0 0
        %1512 = vmatmul.mubr.bf16.gmra.mrb[0].mxu0 %v1328
        %v1513 = vpop.f32.mrb[0].mxu0
        %v1514 = vadd.f32 0.0, %v1513
        %v1515 = vpop.f32.mrb[0].mxu0
        %v1516 = vpop.f32.mrb[0].mxu0
        %v1517 = vadd.f32 0.0, %v1516
        %v1518 = vpop.f32.mrb[0].mxu0
        %1519 = vmatprep.mubr.bf16.mxu0 0
        %1520 = vmatmul.mubr.bf16.gmra.mrb[0].mxu0 %v1329
        %v1521 = vpop.f32.mrb[0].mxu0
        %v1522 = vadd.f32 0.0, %v1521
        %v1523 = vpop.f32.mrb[0].mxu0
        %v1524 = vpop.f32.mrb[0].mxu0
        %v1525 = vadd.f32 0.0, %v1524
        %v1526 = vpop.f32.mrb[0].mxu0
        %1527 = vmatprep.mubr.bf16.mxu0 0
        %1528 = vmatmul.mubr.bf16.gmra.mrb[0].mxu0 %v1330
        %v1529 = vpop.f32.mrb[0].mxu0
        %v1530 = vadd.f32 0.0, %v1529
        %v1531 = vpop.f32.mrb[0].mxu0
        %v1532 = vpop.f32.mrb[0].mxu0
        %v1533 = vadd.f32 0.0, %v1532
        %v1534 = vpop.f32.mrb[0].mxu0
        %1535 = vmatprep.mubr.bf16.mxu0 0
        %1536 = vmatmul.mubr.bf16.gmra.mrb[0].mxu0 %v1331
        %v1537 = vpop.f32.mrb[0].mxu0
        %v1538 = vadd.f32 0.0, %v1537
        %v1539 = vpop.f32.mrb[0].mxu0
        %v1540 = vpop.f32.mrb[0].mxu0
        %v1541 = vadd.f32 0.0, %v1540
        %v1542 = vpop.f32.mrb[0].mxu0
        %1543 = vmatprep.mubr.bf16.mxu0 0
        %1544 = vmatmul.mubr.bf16.gmra.mrb[0].mxu0 %v1332
        %v1545 = vpop.f32.mrb[0].mxu0
        %v1546 = vadd.f32 0.0, %v1545
        %v1547 = vpop.f32.mrb[0].mxu0
        %v1548 = vpop.f32.mrb[0].mxu0
        %v1549 = vadd.f32 0.0, %v1548
        %v1550 = vpop.f32.mrb[0].mxu0
        %1551 = vmatprep.mubr.bf16.mxu0 0
        %1552 = vmatmul.mubr.bf16.gmra.mrb[0].mxu0 %v1333
        %v1553 = vpop.f32.mrb[0].mxu0
        %v1554 = vadd.f32 0.0, %v1553
        %v1555 = vpop.f32.mrb[0].mxu0
        %v1556 = vpop.f32.mrb[0].mxu0
        %v1557 = vadd.f32 0.0, %v1556
        %v1558 = vpop.f32.mrb[0].mxu0
        %1559 = vdwg.mxu0
        %v1560 = vpack.c.bf16 %v1437, %v1434
        %v1561 = vpack.c.bf16 %v1445, %v1442
        %v1562 = vpack.c.bf16 %v1453, %v1450
        %v1563 = vpack.c.bf16 %v1461, %v1458
        %v1564 = vpack.c.bf16 %v1469, %v1466
        %v1565 = vpack.c.bf16 %v1477, %v1474
        %v1566 = vpack.c.bf16 %v1485, %v1482
        %v1567 = vpack.c.bf16 %v1493, %v1490
        %v1568 = vpack.c.bf16 %v1501, %v1498
        %v1569 = vpack.c.bf16 %v1509, %v1506
        %v1570 = vpack.c.bf16 %v1517, %v1514
        %v1571 = vpack.c.bf16 %v1525, %v1522
        %v1572 = vpack.c.bf16 %v1533, %v1530
        %v1573 = vpack.c.bf16 %v1541, %v1538
        %v1574 = vpack.c.bf16 %v1549, %v1546
        %v1575 = vpack.c.bf16 %v1557, %v1554
        %v1577 = vpack.i.b16 %v1350, %v1350
        %v1579 = vlaneseq
        %v1580 = vshrl.u32 %v1579, 7
        %v1581 = vsub.s32 0, %v1580
        %v1582 = vrot.slane %v1577, %v1581
        %v1583 = vadd.bf16 %v1560, %v1582
        %v1584 = vadd.bf16 %v1561, %v1582
        %v1585 = vadd.bf16 %v1562, %v1582
        %v1586 = vadd.bf16 %v1563, %v1582
        %v1587 = vadd.bf16 %v1564, %v1582
        %v1588 = vadd.bf16 %v1565, %v1582
        %v1589 = vadd.bf16 %v1566, %v1582
        %v1590 = vadd.bf16 %v1567, %v1582
        %v1591 = vadd.bf16 %v1568, %v1582
        %v1592 = vadd.bf16 %v1569, %v1582
        %v1593 = vadd.bf16 %v1570, %v1582
        %v1594 = vadd.bf16 %v1571, %v1582
        %v1595 = vadd.bf16 %v1572, %v1582
        %v1596 = vadd.bf16 %v1573, %v1582
        %v1597 = vadd.bf16 %v1574, %v1582
        %v1598 = vadd.bf16 %v1575, %v1582
        %v1599 = vmax.bf16 %v1583, 0
        %v1600 = vmax.bf16 %v1584, 0
        %v1601 = vmax.bf16 %v1585, 0
        %v1602 = vmax.bf16 %v1586, 0
        %v1603 = vmax.bf16 %v1587, 0
        %v1604 = vmax.bf16 %v1588, 0
        %v1605 = vmax.bf16 %v1589, 0
        %v1606 = vmax.bf16 %v1590, 0
        %v1607 = vmax.bf16 %v1591, 0
        %v1608 = vmax.bf16 %v1592, 0
        %v1609 = vmax.bf16 %v1593, 0
        %v1610 = vmax.bf16 %v1594, 0
        %v1611 = vmax.bf16 %v1595, 0
        %v1612 = vmax.bf16 %v1596, 0
        %v1613 = vmax.bf16 %v1597, 0
        %v1614 = vmax.bf16 %v1598, 0
        %v1615 = vld [vmem:[%s9] sm:$0xf]
        %v1616 = vld [vmem:[%s9 + $0x4] sm:$0xf]
        %v1617 = vld [vmem:[%s9 + $0x8] sm:$0xf]
        %v1618 = vld [vmem:[%s9 + $0xc] sm:$0xf]
        %v1619 = vld [vmem:[%s9 + $0x10] sm:$0xf]
        %v1620 = vld [vmem:[%s9 + $0x14] sm:$0xf]
        %v1621 = vld [vmem:[%s9 + $0x18] sm:$0xf]
        %v1622 = vld [vmem:[%s9 + $0x1c] sm:$0xf]
        %v1623 = vld [vmem:[%s9 + $0x20] sm:$0xf]
        %v1624 = vld [vmem:[%s9 + $0x24] sm:$0xf]
        %v1625 = vld [vmem:[%s9 + $0x28] sm:$0xf]
        %v1626 = vld [vmem:[%s9 + $0x2c] sm:$0xf]
        %v1627 = vld [vmem:[%s9 + $0x30] sm:$0xf]
        %v1628 = vld [vmem:[%s9 + $0x34] sm:$0xf]
        %v1629 = vld [vmem:[%s9 + $0x38] sm:$0xf]
        %v1630 = vld [vmem:[%s9 + $0x3c] sm:$0xf]
        %v1631 = vld [vmem:[%s10] sm:$0x1]
        %v1633 = vlaneseq
        %v1634 = vshrl.u32 %v1633, 7
        %v1635 = vsub.s32 0, %v1634
        %v1636 = vrot.slane %v1631, %v1635
        %v1654 = vunpack.c.l.b16 %v1615
        %v1655 = vunpack.c.l.b16 %v1616
        %v1656 = vunpack.c.l.b16 %v1617
        %v1657 = vunpack.c.l.b16 %v1618
        %v1658 = vunpack.c.l.b16 %v1619
        %v1659 = vunpack.c.l.b16 %v1620
        %v1660 = vunpack.c.l.b16 %v1621
        %v1661 = vunpack.c.l.b16 %v1622
        %v1662 = vunpack.c.l.b16 %v1623
        %v1663 = vunpack.c.l.b16 %v1624
        %v1664 = vunpack.c.l.b16 %v1625
        %v1665 = vunpack.c.l.b16 %v1626
        %v1666 = vunpack.c.l.b16 %v1627
        %v1667 = vunpack.c.l.b16 %v1628
        %v1668 = vunpack.c.l.b16 %v1629
        %v1669 = vunpack.c.l.b16 %v1630
        %v1670 = vpack.c.b16 %v1655, %v1654
        %v1671 = vpack.c.b16 %v1657, %v1656
        %v1672 = vpack.c.b16 %v1659, %v1658
        %v1673 = vpack.c.b16 %v1661, %v1660
        %v1674 = vpack.c.b16 %v1663, %v1662
        %v1675 = vpack.c.b16 %v1665, %v1664
        %v1676 = vpack.c.b16 %v1667, %v1666
        %v1677 = vpack.c.b16 %v1669, %v1668
        %1686 = vmatprep.subr.bf16.mxu0 0
        %1687 = vmatpush1.bf16.msra.mxu0 %v1670
        %1688 = vmatprep.subr.bf16.mxu0 0
        %1689 = vmatpush1.bf16.msra.mxu0 %v1671
        %1690 = vmatprep.subr.bf16.mxu0 0
        %1691 = vmatpush1.bf16.msra.mxu0 %v1672
        %1692 = vmatprep.subr.bf16.mxu0 0
        %1693 = vmatpush1.bf16.msra.mxu0 %v1673
        %1694 = vmatprep.subr.bf16.mxu0 0
        %1695 = vmatpush1.bf16.msra.mxu0 %v1674
        %1696 = vmatprep.subr.bf16.mxu0 0
        %1697 = vmatpush1.bf16.msra.mxu0 %v1675
        %1698 = vmatprep.subr.bf16.mxu0 0
        %1699 = vmatpush1.bf16.msra.mxu0 %v1676
        %1700 = vmatprep.subr.bf16.mxu0 0
        %1701 = vmatpush1.bf16.msra.mxu0 %v1677
        %1702 = vmatprep.subr.bf16.mxu0 0
        %1703 = vmatpush1.bf16.msra.mxu0 0
        %1704 = vmatprep.subr.bf16.mxu0 0
        %1705 = vmatpush1.bf16.msra.mxu0 0
        %1706 = vmatprep.subr.bf16.mxu0 0
        %1707 = vmatpush1.bf16.msra.mxu0 0
        %1708 = vmatprep.subr.bf16.mxu0 0
        %1709 = vmatpush1.bf16.msra.mxu0 0
        %1710 = vmatprep.subr.bf16.mxu0 0
        %1711 = vmatpush1.bf16.msra.mxu0 0
        %1712 = vmatprep.subr.bf16.mxu0 0
        %1713 = vmatpush1.bf16.msra.mxu0 0
        %1714 = vmatprep.subr.bf16.mxu0 0
        %1715 = vmatpush1.bf16.msra.mxu0 0
        %1716 = vmatprep.subr.bf16.mxu0 0
        %1717 = vmatpush1.bf16.msra.mxu0 0
        %1718 = vmatprep.mubr.bf16.mxu0 0
        %1719 = vmatmul.mubr.bf16.gmra.mrb[0].mxu0 %v1599
        %v1720 = vpop.f32.mrb[0].mxu0
        %v1721 = vadd.f32 %v1636, %v1720
        %v1722 = vpop.f32.mrb[0].mxu0
        %v1723 = vpop.f32.mrb[0].mxu0
        %v1724 = vadd.f32 %v1636, %v1723
        %v1725 = vpop.f32.mrb[0].mxu0
        %1726 = vmatprep.mubr.bf16.mxu0 0
        %1727 = vmatmul.mubr.bf16.gmra.mrb[0].mxu0 %v1600
        %v1728 = vpop.f32.mrb[0].mxu0
        %v1729 = vadd.f32 %v1636, %v1728
        %v1730 = vpop.f32.mrb[0].mxu0
        %v1731 = vpop.f32.mrb[0].mxu0
        %v1732 = vadd.f32 %v1636, %v1731
        %v1733 = vpop.f32.mrb[0].mxu0
        %1734 = vmatprep.mubr.bf16.mxu0 0
        %1735 = vmatmul.mubr.bf16.gmra.mrb[0].mxu0 %v1601
        %v1736 = vpop.f32.mrb[0].mxu0
        %v1737 = vadd.f32 %v1636, %v1736
        %v1738 = vpop.f32.mrb[0].mxu0
        %v1739 = vpop.f32.mrb[0].mxu0
        %v1740 = vadd.f32 %v1636, %v1739
        %v1741 = vpop.f32.mrb[0].mxu0
        %1742 = vmatprep.mubr.bf16.mxu0 0
        %1743 = vmatmul.mubr.bf16.gmra.mrb[0].mxu0 %v1602
        %v1744 = vpop.f32.mrb[0].mxu0
        %v1745 = vadd.f32 %v1636, %v1744
        %v1746 = vpop.f32.mrb[0].mxu0
        %v1747 = vpop.f32.mrb[0].mxu0
        %v1748 = vadd.f32 %v1636, %v1747
        %v1749 = vpop.f32.mrb[0].mxu0
        %1750 = vmatprep.mubr.bf16.mxu0 0
        %1751 = vmatmul.mubr.bf16.gmra.mrb[0].mxu0 %v1603
        %v1752 = vpop.f32.mrb[0].mxu0
        %v1753 = vadd.f32 %v1636, %v1752
        %v1754 = vpop.f32.mrb[0].mxu0
        %v1755 = vpop.f32.mrb[0].mxu0
        %v1756 = vadd.f32 %v1636, %v1755
        %v1757 = vpop.f32.mrb[0].mxu0
        %1758 = vmatprep.mubr.bf16.mxu0 0
        %1759 = vmatmul.mubr.bf16.gmra.mrb[0].mxu0 %v1604
        %v1760 = vpop.f32.mrb[0].mxu0
        %v1761 = vadd.f32 %v1636, %v1760
        %v1762 = vpop.f32.mrb[0].mxu0
        %v1763 = vpop.f32.mrb[0].mxu0
        %v1764 = vadd.f32 %v1636, %v1763
        %v1765 = vpop.f32.mrb[0].mxu0
        %1766 = vmatprep.mubr.bf16.mxu0 0
        %1767 = vmatmul.mubr.bf16.gmra.mrb[0].mxu0 %v1605
        %v1768 = vpop.f32.mrb[0].mxu0
        %v1769 = vadd.f32 %v1636, %v1768
        %v1770 = vpop.f32.mrb[0].mxu0
        %v1771 = vpop.f32.mrb[0].mxu0
        %v1772 = vadd.f32 %v1636, %v1771
        %v1773 = vpop.f32.mrb[0].mxu0
        %1774 = vmatprep.mubr.bf16.mxu0 0
        %1775 = vmatmul.mubr.bf16.gmra.mrb[0].mxu0 %v1606
        %v1776 = vpop.f32.mrb[0].mxu0
        %v1777 = vadd.f32 %v1636, %v1776
        %v1778 = vpop.f32.mrb[0].mxu0
        %v1779 = vpop.f32.mrb[0].mxu0
        %v1780 = vadd.f32 %v1636, %v1779
        %v1781 = vpop.f32.mrb[0].mxu0
        %1782 = vmatprep.mubr.bf16.mxu0 0
        %1783 = vmatmul.mubr.bf16.gmra.mrb[0].mxu0 %v1607
        %v1784 = vpop.f32.mrb[0].mxu0
        %v1785 = vadd.f32 %v1636, %v1784
        %v1786 = vpop.f32.mrb[0].mxu0
        %v1787 = vpop.f32.mrb[0].mxu0
        %v1788 = vadd.f32 %v1636, %v1787
        %v1789 = vpop.f32.mrb[0].mxu0
        %1790 = vmatprep.mubr.bf16.mxu0 0
        %1791 = vmatmul.mubr.bf16.gmra.mrb[0].mxu0 %v1608
        %v1792 = vpop.f32.mrb[0].mxu0
        %v1793 = vadd.f32 %v1636, %v1792
        %v1794 = vpop.f32.mrb[0].mxu0
        %v1795 = vpop.f32.mrb[0].mxu0
        %v1796 = vadd.f32 %v1636, %v1795
        %v1797 = vpop.f32.mrb[0].mxu0
        %1798 = vmatprep.mubr.bf16.mxu0 0
        %1799 = vmatmul.mubr.bf16.gmra.mrb[0].mxu0 %v1609
        %v1800 = vpop.f32.mrb[0].mxu0
        %v1801 = vadd.f32 %v1636, %v1800
        %v1802 = vpop.f32.mrb[0].mxu0
        %v1803 = vpop.f32.mrb[0].mxu0
        %v1804 = vadd.f32 %v1636, %v1803
        %v1805 = vpop.f32.mrb[0].mxu0
        %1806 = vmatprep.mubr.bf16.mxu0 0
        %1807 = vmatmul.mubr.bf16.gmra.mrb[0].mxu0 %v1610
        %v1808 = vpop.f32.mrb[0].mxu0
        %v1809 = vadd.f32 %v1636, %v1808
        %v1810 = vpop.f32.mrb[0].mxu0
        %v1811 = vpop.f32.mrb[0].mxu0
        %v1812 = vadd.f32 %v1636, %v1811
        %v1813 = vpop.f32.mrb[0].mxu0
        %1814 = vmatprep.mubr.bf16.mxu0 0
        %1815 = vmatmul.mubr.bf16.gmra.mrb[0].mxu0 %v1611
        %v1816 = vpop.f32.mrb[0].mxu0
        %v1817 = vadd.f32 %v1636, %v1816
        %v1818 = vpop.f32.mrb[0].mxu0
        %v1819 = vpop.f32.mrb[0].mxu0
        %v1820 = vadd.f32 %v1636, %v1819
        %v1821 = vpop.f32.mrb[0].mxu0
        %1822 = vmatprep.mubr.bf16.mxu0 0
        %1823 = vmatmul.mubr.bf16.gmra.mrb[0].mxu0 %v1612
        %v1824 = vpop.f32.mrb[0].mxu0
        %v1825 = vadd.f32 %v1636, %v1824
        %v1826 = vpop.f32.mrb[0].mxu0
        %v1827 = vpop.f32.mrb[0].mxu0
        %v1828 = vadd.f32 %v1636, %v1827
        %v1829 = vpop.f32.mrb[0].mxu0
        %1830 = vmatprep.mubr.bf16.mxu0 0
        %1831 = vmatmul.mubr.bf16.gmra.mrb[0].mxu0 %v1613
        %v1832 = vpop.f32.mrb[0].mxu0
        %v1833 = vadd.f32 %v1636, %v1832
        %v1834 = vpop.f32.mrb[0].mxu0
        %v1835 = vpop.f32.mrb[0].mxu0
        %v1836 = vadd.f32 %v1636, %v1835
        %v1837 = vpop.f32.mrb[0].mxu0
        %1838 = vmatprep.mubr.bf16.mxu0 0
        %1839 = vmatmul.mubr.bf16.gmra.mrb[0].mxu0 %v1614
        %v1840 = vpop.f32.mrb[0].mxu0
        %v1841 = vadd.f32 %v1636, %v1840
        %v1842 = vpop.f32.mrb[0].mxu0
        %v1843 = vpop.f32.mrb[0].mxu0
        %v1844 = vadd.f32 %v1636, %v1843
        %v1845 = vpop.f32.mrb[0].mxu0
        %1846 = vdwg.mxu0
        %v1847 = vpack.c.bf16 %v1724, %v1721
        %v1848 = vpack.c.bf16 %v1732, %v1729
        %v1849 = vpack.c.bf16 %v1740, %v1737
        %v1850 = vpack.c.bf16 %v1748, %v1745
        %v1851 = vpack.c.bf16 %v1756, %v1753
        %v1852 = vpack.c.bf16 %v1764, %v1761
        %v1853 = vpack.c.bf16 %v1772, %v1769
        %v1854 = vpack.c.bf16 %v1780, %v1777
        %v1855 = vpack.c.bf16 %v1788, %v1785
        %v1856 = vpack.c.bf16 %v1796, %v1793
        %v1857 = vpack.c.bf16 %v1804, %v1801
        %v1858 = vpack.c.bf16 %v1812, %v1809
        %v1859 = vpack.c.bf16 %v1820, %v1817
        %v1860 = vpack.c.bf16 %v1828, %v1825
        %v1861 = vpack.c.bf16 %v1836, %v1833
        %v1862 = vpack.c.bf16 %v1844, %v1841
        %v1879 = vunpack.c.l.b16 %v1847
        %v1880 = vunpack.c.h.b16 %v1847
        %v1881 = vunpack.c.l.b16 %v1848
        %v1882 = vunpack.c.h.b16 %v1848
        %v1883 = vunpack.c.l.b16 %v1849
        %v1884 = vunpack.c.h.b16 %v1849
        %v1885 = vunpack.c.l.b16 %v1850
        %v1886 = vunpack.c.h.b16 %v1850
        %v1887 = vunpack.c.l.b16 %v1851
        %v1888 = vunpack.c.h.b16 %v1851
        %v1889 = vunpack.c.l.b16 %v1852
        %v1890 = vunpack.c.h.b16 %v1852
        %v1891 = vunpack.c.l.b16 %v1853
        %v1892 = vunpack.c.h.b16 %v1853
        %v1893 = vunpack.c.l.b16 %v1854
        %v1894 = vunpack.c.h.b16 %v1854
        %v1895 = vunpack.c.l.b16 %v1855
        %v1896 = vunpack.c.h.b16 %v1855
        %v1897 = vunpack.c.l.b16 %v1856
        %v1898 = vunpack.c.h.b16 %v1856
        %v1899 = vunpack.c.l.b16 %v1857
        %v1900 = vunpack.c.h.b16 %v1857
        %v1901 = vunpack.c.l.b16 %v1858
        %v1902 = vunpack.c.h.b16 %v1858
        %v1903 = vunpack.c.l.b16 %v1859
        %v1904 = vunpack.c.h.b16 %v1859
        %v1905 = vunpack.c.l.b16 %v1860
        %v1906 = vunpack.c.h.b16 %v1860
        %v1907 = vunpack.c.l.b16 %v1861
        %v1908 = vunpack.c.h.b16 %v1861
        %v1909 = vunpack.c.l.b16 %v1862
        %v1910 = vunpack.c.h.b16 %v1862
        %v1911 = vpack.c.b16 %v1879, %v1879
        %v1912 = vpack.c.b16 %v1880, %v1880
        %v1913 = vpack.c.b16 %v1881, %v1881
        %v1914 = vpack.c.b16 %v1882, %v1882
        %v1915 = vpack.c.b16 %v1883, %v1883
        %v1916 = vpack.c.b16 %v1884, %v1884
        %v1917 = vpack.c.b16 %v1885, %v1885
        %v1918 = vpack.c.b16 %v1886, %v1886
        %v1919 = vpack.c.b16 %v1887, %v1887
        %v1920 = vpack.c.b16 %v1888, %v1888
        %v1921 = vpack.c.b16 %v1889, %v1889
        %v1922 = vpack.c.b16 %v1890, %v1890
        %v1923 = vpack.c.b16 %v1891, %v1891
        %v1924 = vpack.c.b16 %v1892, %v1892
        %v1925 = vpack.c.b16 %v1893, %v1893
        %v1926 = vpack.c.b16 %v1894, %v1894
        %v1927 = vpack.c.b16 %v1895, %v1895
        %v1928 = vpack.c.b16 %v1896, %v1896
        %v1929 = vpack.c.b16 %v1897, %v1897
        %v1930 = vpack.c.b16 %v1898, %v1898
        %v1931 = vpack.c.b16 %v1899, %v1899
        %v1932 = vpack.c.b16 %v1900, %v1900
        %v1933 = vpack.c.b16 %v1901, %v1901
        %v1934 = vpack.c.b16 %v1902, %v1902
        %v1935 = vpack.c.b16 %v1903, %v1903
        %v1936 = vpack.c.b16 %v1904, %v1904
        %v1937 = vpack.c.b16 %v1905, %v1905
        %v1938 = vpack.c.b16 %v1906, %v1906
        %v1939 = vpack.c.b16 %v1907, %v1907
        %v1940 = vpack.c.b16 %v1908, %v1908
        %v1941 = vpack.c.b16 %v1909, %v1909
        %v1942 = vpack.c.b16 %v1910, %v1910
        %1975 = vst [vmem:[%s380] sm:$0xf] %v1911
        %1976 = vst [vmem:[%s380 + $0x4] sm:$0xf] %v1912
        %1977 = vst [vmem:[%s380 + $0x8] sm:$0xf] %v1913
        %1978 = vst [vmem:[%s380 + $0xc] sm:$0xf] %v1914
        %1979 = vst [vmem:[%s380 + $0x10] sm:$0xf] %v1915
        %1980 = vst [vmem:[%s380 + $0x14] sm:$0xf] %v1916
        %1981 = vst [vmem:[%s380 + $0x18] sm:$0xf] %v1917
        %1982 = vst [vmem:[%s380 + $0x1c] sm:$0xf] %v1918
        %1983 = vst [vmem:[%s380 + $0x20] sm:$0xf] %v1919
        %1984 = vst [vmem:[%s380 + $0x24] sm:$0xf] %v1920
        %1985 = vst [vmem:[%s380 + $0x28] sm:$0xf] %v1921
        %1986 = vst [vmem:[%s380 + $0x2c] sm:$0xf] %v1922
        %1987 = vst [vmem:[%s380 + $0x30] sm:$0xf] %v1923
        %1988 = vst [vmem:[%s380 + $0x34] sm:$0xf] %v1924
        %1989 = vst [vmem:[%s380 + $0x38] sm:$0xf] %v1925
        %1990 = vst [vmem:[%s380 + $0x3c] sm:$0xf] %v1926
        %1991 = vst [vmem:[%s380 + $0x40] sm:$0xf] %v1927
        %1992 = vst [vmem:[%s380 + $0x44] sm:$0xf] %v1928
        %1993 = vst [vmem:[%s380 + $0x48] sm:$0xf] %v1929
        %1994 = vst [vmem:[%s380 + $0x4c] sm:$0xf] %v1930
        %1995 = vst [vmem:[%s380 + $0x50] sm:$0xf] %v1931
        %1996 = vst [vmem:[%s380 + $0x54] sm:$0xf] %v1932
        %1997 = vst [vmem:[%s380 + $0x58] sm:$0xf] %v1933
        %1998 = vst [vmem:[%s380 + $0x5c] sm:$0xf] %v1934
        %1999 = vst [vmem:[%s380 + $0x60] sm:$0xf] %v1935
        %2000 = vst [vmem:[%s380 + $0x64] sm:$0xf] %v1936
        %2001 = vst [vmem:[%s380 + $0x68] sm:$0xf] %v1937
        %2002 = vst [vmem:[%s380 + $0x6c] sm:$0xf] %v1938
        %2003 = vst [vmem:[%s380 + $0x70] sm:$0xf] %v1939
        %2004 = vst [vmem:[%s380 + $0x74] sm:$0xf] %v1940
        %2005 = vst [vmem:[%s380 + $0x78] sm:$0xf] %v1941
        %2006 = vst [vmem:[%s380 + $0x7c] sm:$0xf] %v1942
        %s2007 = sand.u32 %s269, 1
        %s2008 = scalar_lea.sflag [#allocation3], %s2007
        %s2009 = sand.u32 %s269, 1
        %s2010 = smul.addr %s2009, 128
        %s2011 = scalar_lea.vmem [#allocation2], %s2010
        // Predicated region
        $region65: #{tpu_custom_call.1} parent=63 // pred_check
          %p2012 = pneg %p279
        $region66: #{tpu_custom_call.1} parent=63 // pred_check_branch
          %2014 = sbr.rel (%p2012) target = $region68
        $region67: #{tpu_custom_call.1} parent=63 // pred_region
          %s2015 = smul.u32 32, %s25
          %s2017 = ssub.s32 2048, 2048
          %2018 = vsyncadd %s2008, %s2017
          %s2019 = smul.addr %s2015, 64
          %s2020 = scalar_lea.hbm %s11, %s2019
          %s2021 = sshll.u32 %s2011, 4
          %s2022 = int_to_ptr.vmem [resolvable:$true] %s2021
          %2027 = dma.vmem_to_hbm [thread:$0]  %s2022, 2048, %s2020, %s2008, 64, 64, 4
        $region68: #{tpu_custom_call.1} parent=63 // pred_fallthru
          _
      $region64: #{tpu_custom_call.1} parent=5 // pred_fallthru
        _
      %p2028 = scmp.le.s32.totalorder 2, %s20
      // Predicated region
      $region69: #{tpu_custom_call.1} parent=5 // pred_check
        %p2029 = pneg %p2028
      $region70: #{tpu_custom_call.1} parent=5 // pred_check_branch
        %2031 = sbr.rel (%p2029) target = $region72
      $region71: #{tpu_custom_call.1} parent=5 // pred_region
        %s2032 = ssub.s32 %s20, 2
        // Predicated region
        $region73: #{tpu_custom_call.1} parent=71 // pred_check
          %p2033 = pneg %p285
        $region74: #{tpu_custom_call.1} parent=71 // pred_check_branch
          %2035 = sbr.rel (%p2033) target = $region76
        $region75: #{tpu_custom_call.1} parent=71 // pred_region
          %s2036 = sand.u32 %s270, 1
          %s2037 = scalar_lea.sflag [#allocation3], %s2036
          %s2038 = sand.u32 %s270, 1
          %s2039 = smul.addr %s2038, 128
          %s2040 = scalar_lea.vmem [#allocation2], %s2039
          %2041 = dma.done %s2037, 2048
        $region76: #{tpu_custom_call.1} parent=71 // pred_fallthru
          _
      $region72: #{tpu_custom_call.1} parent=5 // pred_fallthru
        _
    $region6: #{tpu_custom_call.1} parent=1 // loop_footer
      %s24 = sadd.s32 1, %s20
    $region7: #{tpu_custom_call.1} parent=1 // loop_footer_branch
      %19 = sbr.rel target = $region3
    $region8: #{tpu_custom_call.1} parent=1 // loop_exit
      _
    %2042 = vsyncpa [#allocation3], 1
    %s2043 = scalar_lea.sflag [#allocation3], 1
    %2044 = vsyncpa %s2043, 1

</llo_original>
